<compile_context>
chip_gen: v7x
topology: tpu7x:2x2x1
jax: 0.10.0
libtpu: 0.0.40
codegen_flags: <defaults>
</compile_context>

<pallas_src>
import jax
import jax.numpy as jnp
from jax import lax
from jax.experimental import pallas as pl
from jax.experimental.pallas import tpu as pltpu

# ----------------------------- model dims -----------------------------------
B = 2            # batch (len(input_values))
L = 1024         # raw samples per item
PATCH = 16       # feature-extractor patch (kernel == stride conv)
T = L // PATCH   # 64 frames
H = 32           # hidden size
FFN = 4 * H      # 128
C = 8            # num classes
C_PAD = 128      # lane-dense padded head width (sliced back to C outside)
SUB = 8          # sublane padding for the output block
EPS = 1e-5

# ---------------- packed weight-slab layout (rows of a (352, 128) f32 slab) ----------------
W_LANES = 128
R_WF = 0                    # (PATCH, H)  feature-extractor weight
R_WQ = R_WF + PATCH         # (H, H)      wq * H**-0.5  (attention scale folded in)
R_WK = R_WQ + H             # (H, H)
R_WV = R_WK + H             # (H, H)
R_WO = R_WV + H             # (H, H)
R_W1 = R_WO + H             # (H, FFN)
R_W2 = R_W1 + H             # (FFN, H)
R_WH = R_W2 + FFN           # (H, C_PAD)  head weight / T  (mean-pool factor folded in)
R_BF = R_WH + H             # one bias / LN vector per row from here on
R_LN1G = R_BF + 1
R_LN1B = R_LN1G + 1
R_BQ = R_LN1B + 1           # bq * H**-0.5
R_BK = R_BQ + 1
R_BV = R_BK + 1
R_BO = R_BV + 1
R_LN2G = R_BO + 1
R_LN2B = R_LN2G + 1
R_B1 = R_LN2B + 1
R_B2 = R_B1 + 1
R_BH = R_B2 + 1
W_ROWS = 352                # >= R_BH + 1, multiple of 8


def _gelu(x):
    return jax.nn.gelu(x, approximate=True)


def _layernorm(x, g, b):
    mu = jnp.mean(x, axis=-1, keepdims=True)
    var = jnp.mean((x - mu) ** 2, axis=-1, keepdims=True)
    return (x - mu) * lax.rsqrt(var + EPS) * g + b


# ----------------------------- fused per-item kernel --------------------------
def _fused_item_kernel(patches_ref, w_ref, out_ref):
    # Carve the packed weight slab with static slices (cheap VMEM views/loads).
    w_feat = w_ref[R_WF:R_WF + PATCH, :H]
    wq = w_ref[R_WQ:R_WQ + H, :H]          # pre-scaled by H**-0.5
    wk = w_ref[R_WK:R_WK + H, :H]
    wv = w_ref[R_WV:R_WV + H, :H]
    wo = w_ref[R_WO:R_WO + H, :H]
    w1 = w_ref[R_W1:R_W1 + H, :FFN]
    w2 = w_ref[R_W2:R_W2 + FFN, :H]
    wh = w_ref[R_WH:R_WH + H, :]           # (H, 128), already divided by T
    b_feat = w_ref[R_BF:R_BF + 1, :H]
    ln1_g = w_ref[R_LN1G:R_LN1G + 1, :H]
    ln1_b = w_ref[R_LN1B:R_LN1B + 1, :H]
    bq = w_ref[R_BQ:R_BQ + 1, :H]          # pre-scaled by H**-0.5
    bk = w_ref[R_BK:R_BK + 1, :H]
    bv = w_ref[R_BV:R_BV + 1, :H]
    bo = w_ref[R_BO:R_BO + 1, :H]
    ln2_g = w_ref[R_LN2G:R_LN2G + 1, :H]
    ln2_b = w_ref[R_LN2B:R_LN2B + 1, :H]
    b1 = w_ref[R_B1:R_B1 + 1, :FFN]
    b2 = w_ref[R_B2:R_B2 + 1, :H]
    bh = w_ref[R_BH:R_BH + 1, :]           # (1, 128)

    # 1) feature extractor: patchify conv == (T, PATCH) @ (PATCH, H) matmul
    # TODO(synk): lane-densify to a (T/8,128) x block-diagonal (128,8H) matmul at real dims.
    x = _gelu(jnp.dot(patches_ref[0], w_feat,
                      preferred_element_type=jnp.float32) + b_feat)        # (T, H)

    # 2) pre-LN transformer encoder layer (single head over full H)
    h = _layernorm(x, ln1_g, ln1_b)
    q = jnp.dot(h, wq, preferred_element_type=jnp.float32) + bq            # scale folded in
    k = jnp.dot(h, wk, preferred_element_type=jnp.float32) + bk
    v = jnp.dot(h, wv, preferred_element_type=jnp.float32) + bv
    s = lax.dot_general(q, k, (((1,), (1,)), ((), ())),
                        preferred_element_type=jnp.float32)                # (T, T) = q @ k.T
    s = s - jnp.max(s, axis=-1, keepdims=True)
    p = jnp.exp(s)
    denom = jnp.sum(p, axis=-1, keepdims=True)                             # (T, 1)
    ctx = jnp.dot(p, v, preferred_element_type=jnp.float32)                # unnormalized
    ctx = ctx * pl.reciprocal(denom, approx=False)                         # deferred softmax norm
    x = x + jnp.dot(ctx, wo, preferred_element_type=jnp.float32) + bo
    h2 = _layernorm(x, ln2_g, ln2_b)
    ff = _gelu(jnp.dot(h2, w1, preferred_element_type=jnp.float32) + b1)
    x = x + jnp.dot(ff, w2, preferred_element_type=jnp.float32) + b2       # last_hidden (T, H)

    # 3) time-mean as an MXU matmul fused with the classification head.
    # ones(8, T) @ hidden gives 8 identical rows of column sums; 1/T is folded into wh.
    pooled = jnp.dot(jnp.ones((SUB, T), jnp.float32), x,
                     preferred_element_type=jnp.float32)                   # (8, H)
    logits = jnp.dot(pooled, wh, preferred_element_type=jnp.float32) + bh  # (8, 128)
    out_ref[0] = logits                                                    # lane-dense store


# ----------------------------- one-time param prep -----------------------------
def prepare_packed_params(p):
    """Pack all weights/biases into one (W_ROWS, 128) f32 slab; fold constant scales."""
    scale = H ** -0.5
    w = jnp.zeros((W_ROWS, W_LANES), jnp.float32)
    w = w.at[R_WF:R_WF + PATCH, :H].set(p["w_feat"])
    w = w.at[R_WQ:R_WQ + H, :H].set(p["wq"] * scale)
    w = w.at[R_WK:R_WK + H, :H].set(p["wk"])
    w = w.at[R_WV:R_WV + H, :H].set(p["wv"])
    w = w.at[R_WO:R_WO + H, :H].set(p["wo"])
    w = w.at[R_W1:R_W1 + H, :FFN].set(p["w1"])
    w = w.at[R_W2:R_W2 + FFN, :H].set(p["w2"])
    w = w.at[R_WH:R_WH + H, :C].set(p["w_head"] / T)          # mean-pool factor folded in
    w = w.at[R_BF, :H].set(p["b_feat"][0])
    w = w.at[R_LN1G, :H].set(p["ln1_g"][0])
    w = w.at[R_LN1B, :H].set(p["ln1_b"][0])
    w = w.at[R_BQ, :H].set(p["bq"][0] * scale)
    w = w.at[R_BK, :H].set(p["bk"][0])
    w = w.at[R_BV, :H].set(p["bv"][0])
    w = w.at[R_BO, :H].set(p["bo"][0])
    w = w.at[R_LN2G, :H].set(p["ln2_g"][0])
    w = w.at[R_LN2B, :H].set(p["ln2_b"][0])
    w = w.at[R_B1, :FFN].set(p["b1"][0])
    w = w.at[R_B2, :H].set(p["b2"][0])
    w = w.at[R_BH, :C].set(p["b_head"][0])
    return w


# ----------------------------- jitted forward ----------------------------------
@jax.jit
def wav2vec2_lora_cls_forward(input_values, wslab):
    Bn, Ln = input_values.shape
    Tn = Ln // PATCH
    patches = input_values.astype(jnp.float32).reshape(Bn, Tn, PATCH)

    out = pl.pallas_call(
        _fused_item_kernel,
        out_shape=jax.ShapeDtypeStruct((Bn, SUB, C_PAD), jnp.float32),
        grid_spec=pltpu.PrefetchScalarGridSpec(
            num_scalar_prefetch=0,
            grid=(Bn,),                                            # one item per grid step
            in_specs=[
                pl.BlockSpec((1, Tn, PATCH), lambda b: (b, 0, 0)),  # per-item patches
                pl.BlockSpec((W_ROWS, W_LANES), lambda b: (0, 0)),  # weight slab (fetched once)
            ],
            out_specs=pl.BlockSpec((1, SUB, C_PAD), lambda b: (b, 0, 0)),
        ),
        compiler_params=pltpu.CompilerParams(
            dimension_semantics=("parallel",)),                    # both TCs on v7x
    )(patches, wslab)
    return out[:, 0, :C]


# ----------------------------- pure-JAX reference ------------------------------
def reference_forward(input_values, p):
    x = input_values.astype(jnp.float32).reshape(B * T, PATCH)
    x = _gelu(x @ p["w_feat"] + p["b_feat"]).reshape(B, T, H)

    def one_item(xi):
        h = _layernorm(xi, p["ln1_g"], p["ln1_b"])
        q, k, v = h @ p["wq"] + p["bq"], h @ p["wk"] + p["bk"], h @ p["wv"] + p["bv"]
        s = (q @ k.T) * (H ** -0.5)
        a = jax.nn.softmax(s, axis=-1)
        xi = xi + (a @ v) @ p["wo"] + p["bo"]
        h2 = _layernorm(xi, p["ln2_g"], p["ln2_b"])
        xi = xi + _gelu(h2 @ p["w1"] + p["b1"]) @ p["w2"] + p["b2"]
        return jnp.mean(xi, axis=0)                 # torch.mean(last_hidden, dim=1)

    pooled = jnp.stack([one_item(x[b]) for b in range(B)])   # torch.stack
    return pooled @ p["w_head"] + p["b_head"]                 # classification head


# ----------------------------- param init --------------------------------------
def init_params(key):
    ks = jax.random.split(key, 8)
    s = 0.05
    return {
        "w_feat": s * jax.random.normal(ks[0], (PATCH, H), jnp.float32),
        "b_feat": jnp.zeros((1, H), jnp.float32),
        "ln1_g": jnp.ones((1, H), jnp.float32),
        "ln1_b": jnp.zeros((1, H), jnp.float32),
        "wq": s * jax.random.normal(ks[1], (H, H), jnp.float32),
        "bq": jnp.zeros((1, H), jnp.float32),
        "wk": s * jax.random.normal(ks[2], (H, H), jnp.float32),
        "bk": jnp.zeros((1, H), jnp.float32),
        "wv": s * jax.random.normal(ks[3], (H, H), jnp.float32),
        "bv": jnp.zeros((1, H), jnp.float32),
        "wo": s * jax.random.normal(ks[4], (H, H), jnp.float32),
        "bo": jnp.zeros((1, H), jnp.float32),
        "ln2_g": jnp.ones((1, H), jnp.float32),
        "ln2_b": jnp.zeros((1, H), jnp.float32),
        "w1": s * jax.random.normal(ks[5], (H, FFN), jnp.float32),
        "b1": jnp.zeros((1, FFN), jnp.float32),
        "w2": s * jax.random.normal(ks[6], (FFN, H), jnp.float32),
        "b2": jnp.zeros((1, H), jnp.float32),
        "w_head": s * jax.random.normal(ks[7], (H, C), jnp.float32),
        "b_head": jnp.zeros((1, C), jnp.float32),
    }


if __name__ == "__main__":
    key = jax.random.PRNGKey(0)
    k_in, k_p = jax.random.split(key)
    input_values = jax.random.normal(k_in, (B, L), jnp.float32)   # raw audio batch
    params = init_params(k_p)

    wslab = jax.block_until_ready(prepare_packed_params(params))  # one-time weight prep

    logits = wav2vec2_lora_cls_forward(input_values, wslab)
    logits = jax.block_until_ready(logits)

    ref = reference_forward(input_values, params)
    assert logits.shape == (B, C)
    assert jnp.allclose(logits, ref, atol=1e-4, rtol=1e-4), "mismatch vs JAX reference"
    print("KERNEL_OK")
</pallas_src>

<mosaic_0001>
module attributes {stable_mosaic.version = 11 : i64} {
  func.func @_fused_item_kernel(%arg0: i32, %arg1: memref<1x64x16xf32, #tpu.memory_space<vmem>>, %arg2: memref<352x128xf32, #tpu.memory_space<vmem>>, %arg3: memref<1x8x128xf32, #tpu.memory_space<vmem>>) attributes {dimension_semantics = [#tpu.dimension_semantics<parallel>], iteration_bounds = array<i64: 2>, scalar_prefetch = 0 : i64, scratch_operands = 0 : i64, tpu.core_type = #tpu.core_type<tc>, window_params = [{transform_indices = @transform_0, window_bounds = array<i64: 1, 64, 16>}, {pipeline_mode = #tpu.pipeline_mode<synchronous>, transform_indices = @transform_1, window_bounds = array<i64: 352, 128>}, {transform_indices = @transform_2, window_bounds = array<i64: 1, 8, 128>}]} {
    %c0 = arith.constant 0 : index
    %c0_0 = arith.constant 0 : index
    %0 = vector.load %arg2[%c0, %c0_0] : memref<352x128xf32, #tpu.memory_space<vmem>>, vector<16x32xf32>
    %c16 = arith.constant 16 : index
    %c0_1 = arith.constant 0 : index
    %1 = vector.load %arg2[%c16, %c0_1] : memref<352x128xf32, #tpu.memory_space<vmem>>, vector<32x32xf32>
    %c48 = arith.constant 48 : index
    %c0_2 = arith.constant 0 : index
    %2 = vector.load %arg2[%c48, %c0_2] : memref<352x128xf32, #tpu.memory_space<vmem>>, vector<32x32xf32>
    %c80 = arith.constant 80 : index
    %c0_3 = arith.constant 0 : index
    %3 = vector.load %arg2[%c80, %c0_3] : memref<352x128xf32, #tpu.memory_space<vmem>>, vector<32x32xf32>
    %c112 = arith.constant 112 : index
    %c0_4 = arith.constant 0 : index
    %4 = vector.load %arg2[%c112, %c0_4] : memref<352x128xf32, #tpu.memory_space<vmem>>, vector<32x32xf32>
    %c144 = arith.constant 144 : index
    %c0_5 = arith.constant 0 : index
    %5 = vector.load %arg2[%c144, %c0_5] : memref<352x128xf32, #tpu.memory_space<vmem>>, vector<32x128xf32>
    %c176 = arith.constant 176 : index
    %c0_6 = arith.constant 0 : index
    %6 = vector.load %arg2[%c176, %c0_6] : memref<352x128xf32, #tpu.memory_space<vmem>>, vector<128x32xf32>
    %c304 = arith.constant 304 : index
    %c0_7 = arith.constant 0 : index
    %7 = vector.load %arg2[%c304, %c0_7] : memref<352x128xf32, #tpu.memory_space<vmem>>, vector<32x128xf32>
    %c336 = arith.constant 336 : index
    %c0_8 = arith.constant 0 : index
    %8 = vector.load %arg2[%c336, %c0_8] : memref<352x128xf32, #tpu.memory_space<vmem>>, vector<1x32xf32>
    %c337 = arith.constant 337 : index
    %c0_9 = arith.constant 0 : index
    %9 = vector.load %arg2[%c337, %c0_9] : memref<352x128xf32, #tpu.memory_space<vmem>>, vector<1x32xf32>
    %c338 = arith.constant 338 : index
    %c0_10 = arith.constant 0 : index
    %10 = vector.load %arg2[%c338, %c0_10] : memref<352x128xf32, #tpu.memory_space<vmem>>, vector<1x32xf32>
    %c339 = arith.constant 339 : index
    %c0_11 = arith.constant 0 : index
    %11 = vector.load %arg2[%c339, %c0_11] : memref<352x128xf32, #tpu.memory_space<vmem>>, vector<1x32xf32>
    %c340 = arith.constant 340 : index
    %c0_12 = arith.constant 0 : index
    %12 = vector.load %arg2[%c340, %c0_12] : memref<352x128xf32, #tpu.memory_space<vmem>>, vector<1x32xf32>
    %c341 = arith.constant 341 : index
    %c0_13 = arith.constant 0 : index
    %13 = vector.load %arg2[%c341, %c0_13] : memref<352x128xf32, #tpu.memory_space<vmem>>, vector<1x32xf32>
    %c342 = arith.constant 342 : index
    %c0_14 = arith.constant 0 : index
    %14 = vector.load %arg2[%c342, %c0_14] : memref<352x128xf32, #tpu.memory_space<vmem>>, vector<1x32xf32>
    %c343 = arith.constant 343 : index
    %c0_15 = arith.constant 0 : index
    %15 = vector.load %arg2[%c343, %c0_15] : memref<352x128xf32, #tpu.memory_space<vmem>>, vector<1x32xf32>
    %c344 = arith.constant 344 : index
    %c0_16 = arith.constant 0 : index
    %16 = vector.load %arg2[%c344, %c0_16] : memref<352x128xf32, #tpu.memory_space<vmem>>, vector<1x32xf32>
    %c345 = arith.constant 345 : index
    %c0_17 = arith.constant 0 : index
    %17 = vector.load %arg2[%c345, %c0_17] : memref<352x128xf32, #tpu.memory_space<vmem>>, vector<1x128xf32>
    %c346 = arith.constant 346 : index
    %c0_18 = arith.constant 0 : index
    %18 = vector.load %arg2[%c346, %c0_18] : memref<352x128xf32, #tpu.memory_space<vmem>>, vector<1x32xf32>
    %c347 = arith.constant 347 : index
    %c0_19 = arith.constant 0 : index
    %19 = vector.load %arg2[%c347, %c0_19] : memref<352x128xf32, #tpu.memory_space<vmem>>, vector<1x128xf32>
    %c0_20 = arith.constant 0 : index
    %c0_21 = arith.constant 0 : index
    %c0_22 = arith.constant 0 : index
    %20 = vector.load %arg1[%c0_20, %c0_21, %c0_22] : memref<1x64x16xf32, #tpu.memory_space<vmem>>, vector<1x64x16xf32>
    %21 = vector.shape_cast %20 : vector<1x64x16xf32> to vector<64x16xf32>
    %cst = arith.constant dense<0.000000e+00> : vector<64x32xf32>
    %22 = tpu.matmul %21, %0, %cst {dimension_numbers = #tpu.dot_dimension_numbers<[1], [0], [0], [1], [0, 0, 1, 1], [], []>} : vector<64x16xf32>, vector<16x32xf32>, vector<64x32xf32> -> vector<64x32xf32>
    %23 = vector.broadcast %8 : vector<1x32xf32> to vector<64x32xf32>
    %24 = arith.addf %22, %23 : vector<64x32xf32>
    %25 = arith.mulf %24, %24 : vector<64x32xf32>
    %26 = arith.mulf %24, %25 : vector<64x32xf32>
    %cst_23 = arith.constant 4.471500e-02 : f32
    %27 = vector.broadcast %cst_23 : f32 to vector<64x32xf32>
    %28 = arith.mulf %27, %26 : vector<64x32xf32>
    %29 = arith.addf %24, %28 : vector<64x32xf32>
    %cst_24 = arith.constant 0.797884583 : f32
    %30 = vector.broadcast %cst_24 : f32 to vector<64x32xf32>
    %31 = arith.mulf %30, %29 : vector<64x32xf32>
    %32 = math.tanh %31 : vector<64x32xf32>
    %cst_25 = arith.constant 1.000000e+00 : f32
    %33 = vector.broadcast %cst_25 : f32 to vector<64x32xf32>
    %34 = arith.addf %33, %32 : vector<64x32xf32>
    %cst_26 = arith.constant 5.000000e-01 : f32
    %35 = vector.broadcast %cst_26 : f32 to vector<64x32xf32>
    %36 = arith.mulf %35, %34 : vector<64x32xf32>
    %37 = arith.mulf %24, %36 : vector<64x32xf32>
    %cst_27 = arith.constant dense<0.000000e+00> : vector<64xf32>
    %38 = vector.multi_reduction <add>, %37, %cst_27 [1] : vector<64x32xf32> to vector<64xf32>
    %39 = vector.shape_cast %38 : vector<64xf32> to vector<64x1xf32>
    %cst_28 = arith.constant 3.200000e+01 : f32
    %40 = vector.broadcast %cst_28 : f32 to vector<64x1xf32>
    %41 = arith.divf %39, %40 : vector<64x1xf32>
    %42 = vector.broadcast %41 : vector<64x1xf32> to vector<64x32xf32>
    %43 = arith.subf %37, %42 : vector<64x32xf32>
    %44 = arith.mulf %43, %43 : vector<64x32xf32>
    %cst_29 = arith.constant dense<0.000000e+00> : vector<64xf32>
    %45 = vector.multi_reduction <add>, %44, %cst_29 [1] : vector<64x32xf32> to vector<64xf32>
    %46 = vector.shape_cast %45 : vector<64xf32> to vector<64x1xf32>
    %cst_30 = arith.constant 3.200000e+01 : f32
    %47 = vector.broadcast %cst_30 : f32 to vector<64x1xf32>
    %48 = arith.divf %46, %47 : vector<64x1xf32>
    %49 = vector.broadcast %41 : vector<64x1xf32> to vector<64x32xf32>
    %50 = arith.subf %37, %49 : vector<64x32xf32>
    %cst_31 = arith.constant 9.99999974E-6 : f32
    %51 = vector.broadcast %cst_31 : f32 to vector<64x1xf32>
    %52 = arith.addf %48, %51 : vector<64x1xf32>
    %53 = math.rsqrt %52 : vector<64x1xf32>
    %54 = vector.broadcast %53 : vector<64x1xf32> to vector<64x32xf32>
    %55 = arith.mulf %50, %54 : vector<64x32xf32>
    %56 = vector.broadcast %9 : vector<1x32xf32> to vector<64x32xf32>
    %57 = arith.mulf %55, %56 : vector<64x32xf32>
    %58 = vector.broadcast %10 : vector<1x32xf32> to vector<64x32xf32>
    %59 = arith.addf %57, %58 : vector<64x32xf32>
    %cst_32 = arith.constant dense<0.000000e+00> : vector<64x32xf32>
    %60 = tpu.matmul %59, %1, %cst_32 {dimension_numbers = #tpu.dot_dimension_numbers<[1], [0], [0], [1], [0, 0, 1, 1], [], []>} : vector<64x32xf32>, vector<32x32xf32>, vector<64x32xf32> -> vector<64x32xf32>
    %61 = vector.broadcast %11 : vector<1x32xf32> to vector<64x32xf32>
    %62 = arith.addf %60, %61 : vector<64x32xf32>
    %cst_33 = arith.constant dense<0.000000e+00> : vector<64x32xf32>
    %63 = tpu.matmul %59, %2, %cst_33 {dimension_numbers = #tpu.dot_dimension_numbers<[1], [0], [0], [1], [0, 0, 1, 1], [], []>} : vector<64x32xf32>, vector<32x32xf32>, vector<64x32xf32> -> vector<64x32xf32>
    %64 = vector.broadcast %12 : vector<1x32xf32> to vector<64x32xf32>
    %65 = arith.addf %63, %64 : vector<64x32xf32>
    %cst_34 = arith.constant dense<0.000000e+00> : vector<64x32xf32>
    %66 = tpu.matmul %59, %3, %cst_34 {dimension_numbers = #tpu.dot_dimension_numbers<[1], [0], [0], [1], [0, 0, 1, 1], [], []>} : vector<64x32xf32>, vector<32x32xf32>, vector<64x32xf32> -> vector<64x32xf32>
    %67 = vector.broadcast %13 : vector<1x32xf32> to vector<64x32xf32>
    %68 = arith.addf %66, %67 : vector<64x32xf32>
    %cst_35 = arith.constant dense<0.000000e+00> : vector<64x64xf32>
    %69 = tpu.matmul %62, %65, %cst_35 {dimension_numbers = #tpu.dot_dimension_numbers<[1], [1], [0], [0], [0, 0, 1, 0], [], []>} : vector<64x32xf32>, vector<64x32xf32>, vector<64x64xf32> -> vector<64x64xf32>
    %cst_36 = arith.constant dense<0xFF800000> : vector<64xf32>
    %70 = vector.multi_reduction <maximumf>, %69, %cst_36 [1] : vector<64x64xf32> to vector<64xf32>
    %71 = vector.shape_cast %70 : vector<64xf32> to vector<64x1xf32>
    %72 = vector.broadcast %71 : vector<64x1xf32> to vector<64x64xf32>
    %73 = arith.subf %69, %72 : vector<64x64xf32>
    %74 = math.exp %73 : vector<64x64xf32>
    %cst_37 = arith.constant dense<0.000000e+00> : vector<64xf32>
    %75 = vector.multi_reduction <add>, %74, %cst_37 [1] : vector<64x64xf32> to vector<64xf32>
    %76 = vector.shape_cast %75 : vector<64xf32> to vector<64x1xf32>
    %cst_38 = arith.constant dense<0.000000e+00> : vector<64x32xf32>
    %77 = tpu.matmul %74, %68, %cst_38 {dimension_numbers = #tpu.dot_dimension_numbers<[1], [0], [0], [1], [0, 0, 1, 1], [], []>} : vector<64x64xf32>, vector<64x32xf32>, vector<64x32xf32> -> vector<64x32xf32>
    %78 = tpu.reciprocal %76 : vector<64x1xf32> -> vector<64x1xf32>
    %79 = vector.broadcast %78 : vector<64x1xf32> to vector<64x32xf32>
    %80 = arith.mulf %77, %79 : vector<64x32xf32>
    %cst_39 = arith.constant dense<0.000000e+00> : vector<64x32xf32>
    %81 = tpu.matmul %80, %4, %cst_39 {dimension_numbers = #tpu.dot_dimension_numbers<[1], [0], [0], [1], [0, 0, 1, 1], [], []>} : vector<64x32xf32>, vector<32x32xf32>, vector<64x32xf32> -> vector<64x32xf32>
    %82 = arith.addf %37, %81 : vector<64x32xf32>
    %83 = vector.broadcast %14 : vector<1x32xf32> to vector<64x32xf32>
    %84 = arith.addf %82, %83 : vector<64x32xf32>
    %cst_40 = arith.constant dense<0.000000e+00> : vector<64xf32>
    %85 = vector.multi_reduction <add>, %84, %cst_40 [1] : vector<64x32xf32> to vector<64xf32>
    %86 = vector.shape_cast %85 : vector<64xf32> to vector<64x1xf32>
    %cst_41 = arith.constant 3.200000e+01 : f32
    %87 = vector.broadcast %cst_41 : f32 to vector<64x1xf32>
    %88 = arith.divf %86, %87 : vector<64x1xf32>
    %89 = vector.broadcast %88 : vector<64x1xf32> to vector<64x32xf32>
    %90 = arith.subf %84, %89 : vector<64x32xf32>
    %91 = arith.mulf %90, %90 : vector<64x32xf32>
    %cst_42 = arith.constant dense<0.000000e+00> : vector<64xf32>
    %92 = vector.multi_reduction <add>, %91, %cst_42 [1] : vector<64x32xf32> to vector<64xf32>
    %93 = vector.shape_cast %92 : vector<64xf32> to vector<64x1xf32>
    %cst_43 = arith.constant 3.200000e+01 : f32
    %94 = vector.broadcast %cst_43 : f32 to vector<64x1xf32>
    %95 = arith.divf %93, %94 : vector<64x1xf32>
    %96 = vector.broadcast %88 : vector<64x1xf32> to vector<64x32xf32>
    %97 = arith.subf %84, %96 : vector<64x32xf32>
    %cst_44 = arith.constant 9.99999974E-6 : f32
    %98 = vector.broadcast %cst_44 : f32 to vector<64x1xf32>
    %99 = arith.addf %95, %98 : vector<64x1xf32>
    %100 = math.rsqrt %99 : vector<64x1xf32>
    %101 = vector.broadcast %100 : vector<64x1xf32> to vector<64x32xf32>
    %102 = arith.mulf %97, %101 : vector<64x32xf32>
    %103 = vector.broadcast %15 : vector<1x32xf32> to vector<64x32xf32>
    %104 = arith.mulf %102, %103 : vector<64x32xf32>
    %105 = vector.broadcast %16 : vector<1x32xf32> to vector<64x32xf32>
    %106 = arith.addf %104, %105 : vector<64x32xf32>
    %cst_45 = arith.constant dense<0.000000e+00> : vector<64x128xf32>
    %107 = tpu.matmul %106, %5, %cst_45 {dimension_numbers = #tpu.dot_dimension_numbers<[1], [0], [0], [1], [0, 0, 1, 1], [], []>} : vector<64x32xf32>, vector<32x128xf32>, vector<64x128xf32> -> vector<64x128xf32>
    %108 = vector.broadcast %17 : vector<1x128xf32> to vector<64x128xf32>
    %109 = arith.addf %107, %108 : vector<64x128xf32>
    %110 = arith.mulf %109, %109 : vector<64x128xf32>
    %111 = arith.mulf %109, %110 : vector<64x128xf32>
    %cst_46 = arith.constant 4.471500e-02 : f32
    %112 = vector.broadcast %cst_46 : f32 to vector<64x128xf32>
    %113 = arith.mulf %112, %111 : vector<64x128xf32>
    %114 = arith.addf %109, %113 : vector<64x128xf32>
    %cst_47 = arith.constant 0.797884583 : f32
    %115 = vector.broadcast %cst_47 : f32 to vector<64x128xf32>
    %116 = arith.mulf %115, %114 : vector<64x128xf32>
    %117 = math.tanh %116 : vector<64x128xf32>
    %cst_48 = arith.constant 1.000000e+00 : f32
    %118 = vector.broadcast %cst_48 : f32 to vector<64x128xf32>
    %119 = arith.addf %118, %117 : vector<64x128xf32>
    %cst_49 = arith.constant 5.000000e-01 : f32
    %120 = vector.broadcast %cst_49 : f32 to vector<64x128xf32>
    %121 = arith.mulf %120, %119 : vector<64x128xf32>
    %122 = arith.mulf %109, %121 : vector<64x128xf32>
    %cst_50 = arith.constant dense<0.000000e+00> : vector<64x32xf32>
    %123 = tpu.matmul %122, %6, %cst_50 {dimension_numbers = #tpu.dot_dimension_numbers<[1], [0], [0], [1], [0, 0, 1, 1], [], []>} : vector<64x128xf32>, vector<128x32xf32>, vector<64x32xf32> -> vector<64x32xf32>
    %124 = arith.addf %84, %123 : vector<64x32xf32>
    %125 = vector.broadcast %18 : vector<1x32xf32> to vector<64x32xf32>
    %126 = arith.addf %124, %125 : vector<64x32xf32>
    %cst_51 = arith.constant 1.000000e+00 : f32
    %127 = vector.broadcast %cst_51 : f32 to vector<8x64xf32>
    %cst_52 = arith.constant dense<0.000000e+00> : vector<8x32xf32>
    %128 = tpu.matmul %127, %126, %cst_52 {dimension_numbers = #tpu.dot_dimension_numbers<[1], [0], [0], [1], [0, 0, 1, 1], [], []>} : vector<8x64xf32>, vector<64x32xf32>, vector<8x32xf32> -> vector<8x32xf32>
    %cst_53 = arith.constant dense<0.000000e+00> : vector<8x128xf32>
    %129 = tpu.matmul %128, %7, %cst_53 {dimension_numbers = #tpu.dot_dimension_numbers<[1], [0], [0], [1], [0, 0, 1, 1], [], []>} : vector<8x32xf32>, vector<32x128xf32>, vector<8x128xf32> -> vector<8x128xf32>
    %130 = vector.broadcast %19 : vector<1x128xf32> to vector<8x128xf32>
    %131 = arith.addf %129, %130 : vector<8x128xf32>
    %c0_54 = arith.constant 0 : index
    %c0_55 = arith.constant 0 : index
    %c0_56 = arith.constant 0 : index
    %132 = vector.load %arg3[%c0_54, %c0_55, %c0_56] : memref<1x8x128xf32, #tpu.memory_space<vmem>>, vector<1x8x128xf32>
    %133 = vector.shape_cast %132 : vector<1x8x128xf32> to vector<8x128xf32>
    %134 = vector.shape_cast %131 : vector<8x128xf32> to vector<1x8x128xf32>
    tpu.vector_store %arg3[%c0_54, %c0_55, %c0_56], %134 {strides = array<i32>} : memref<1x8x128xf32, #tpu.memory_space<vmem>>, vector<1x8x128xf32>,
    return
  }
  func.func @transform_0(%arg0: i32) -> (i32, i32, i32) {
    %c0_i32 = arith.constant 0 : i32
    %c0_i32_0 = arith.constant 0 : i32
    %c0_i32_1 = arith.constant 0 : i32
    return %arg0, %c0_i32, %c0_i32_0 : i32, i32, i32
  }
  func.func @transform_1(%arg0: i32) -> (i32, i32) {
    %c0_i32 = arith.constant 0 : i32
    %c0_i32_0 = arith.constant 0 : i32
    %c0_i32_1 = arith.constant 0 : i32
    return %c0_i32, %c0_i32_0 : i32, i32
  }
  func.func @transform_2(%arg0: i32) -> (i32, i32, i32) {
    %c0_i32 = arith.constant 0 : i32
    %c0_i32_0 = arith.constant 0 : i32
    %c0_i32_1 = arith.constant 0 : i32
    return %arg0, %c0_i32, %c0_i32_0 : i32, i32, i32
  }
}

</mosaic_0001>

<llo_original>
// kernel: wav2vec2_lora_cls_forward.1
$region0: #{wav2vec2_lora_cls_forward.1}
  #allocation0 [shape = 'u32[]', space=smem, size = 0x4, offset = 0x4, fixed_abs, tag = 'smem constant byte address 0x4 - core index']
  #allocation1 [shape = 'u32[144,128]{1,0:T(1,128)}', space=vmem, size = 0x12000, scoped, tag = 'internal scratch']
  %s0 = inlined_call_operand.vmem [shape: f32[2,64,16], index: 0, kind: input, shape index: {}]
  %s1 = inlined_call_operand.hbm [shape: f32[352,128], index: 1, kind: input, shape index: {}]
  %s2 = inlined_call_operand.vmem [shape: f32[2,8,128], index: 2, kind: output, shape index: {}]
  %s3 = sld [smem:[#allocation0]]
  $region45: #{wav2vec2_lora_cls_forward.1} parent=0
    _
  %s5 = ssub.s32 1, %s3
  %s6 = scalar_select 0, %s5, %s3
  $region1: #{wav2vec2_lora_cls_forward.1} parent=0
    #allocation2 [shape = 'u8[180224]{0}', space=vmem, size = 0x2c000, scoped, tag = 'input window, operand 1, single buffered']
    #allocation3 [shape = 's32[2]{0}', space=sflag, size = 0x8, scoped, tag = 'scoped memory for wav2vec2_lora_cls_forward.1']
    %7 = vsyncpa [#allocation3], 0
    loop: start=0, step=1, limit=4
    $region2: #{wav2vec2_lora_cls_forward.1} parent=1 // loop_pre_header
      _
    $region3: #{wav2vec2_lora_cls_forward.1} parent=1 // loop_header
      %s9 = sphi 0, %s13
      %p10 = scmp.ge.s32.totalorder %s9, 4
      %s19 = sphi 0, %s21
      %s22 = sphi 0, %s19
      %s23 = sphi 0, %s22
      %s39 = sphi 0, %s23
      %s43 = sphi 0, %s43
      %s45 = sphi 0, %s43
      %s46 = sphi 0, %s45
      %s60 = sphi 0, %s46
      %s66 = sphi 0, %s68
      %s69 = sphi 0, %s66
      %s70 = sphi 0, %s69
      %s86 = sphi 0, %s70
    $region4: #{wav2vec2_lora_cls_forward.1} parent=1 // loop_header_branch
      %12 = sbr.rel (%p10) target = $region8
    $region5: #{wav2vec2_lora_cls_forward.1} parent=1 // loop_body
      %s14 = ssub.s32 %s9, 1
      %s15 = ssub.s32 %s9, 2
      %s16 = sadd.s32 %s9, 1
      %s17 = ssub.s32 %s9, %s16
      %p18 = scmp.eq.s32.totalorder %s17, 0
      %s20 = sadd.s32 %s19, 1
      %s21 = scalar_select %p18, %s19, %s20
      %p24 = pneg %p18
      %p25 = scmp.eq.s32.totalorder %s9, 1
      %p26 = por %p24, %p25
      %p27 = scmp.ne.s32.totalorder %s19, %s22
      %p28 = scmp.eq.s32.totalorder %s9, 0
      %p29 = por %p27, %p28
      %p30 = scmp.ne.s32.totalorder %s19, %s22
      %p31 = scmp.eq.s32.totalorder %s14, 1
      %p32 = por %p30, %p31
      %p33 = scmp.ne.s32.totalorder %s22, %s23
      %p34 = scmp.eq.s32.totalorder %s14, 0
      %p35 = por %p33, %p34
      %p36 = scmp.ne.s32.totalorder %s22, %s23
      %p37 = scmp.eq.s32.totalorder %s15, 1
      %p38 = por %p36, %p37
      %p40 = scmp.ne.s32.totalorder %s23, %s39
      %p41 = scmp.eq.s32.totalorder %s15, 0
      %p42 = por %p40, %p41
      %s44 = sadd.s32 %s43, 1
      %p47 = scmp.eq.s32.totalorder %s9, 1
      %p48 = scmp.ne.s32.totalorder %s43, %s45
      %p49 = scmp.eq.s32.totalorder %s9, 0
      %p50 = por %p48, %p49
      %p51 = scmp.ne.s32.totalorder %s43, %s45
      %p52 = scmp.eq.s32.totalorder %s14, 1
      %p53 = por %p51, %p52
      %p54 = scmp.ne.s32.totalorder %s45, %s46
      %p55 = scmp.eq.s32.totalorder %s14, 0
      %p56 = por %p54, %p55
      %p57 = scmp.ne.s32.totalorder %s45, %s46
      %p58 = scmp.eq.s32.totalorder %s15, 1
      %p59 = por %p57, %p58
      %p61 = scmp.ne.s32.totalorder %s46, %s60
      %p62 = scmp.eq.s32.totalorder %s15, 0
      %p63 = por %p61, %p62
      %s64 = ssub.s32 %s9, %s16
      %p65 = scmp.eq.s32.totalorder %s64, 0
      %s67 = sadd.s32 %s66, 1
      %s68 = scalar_select %p65, %s66, %s67
      %p71 = pneg %p65
      %p72 = scmp.eq.s32.totalorder %s9, 1
      %p73 = por %p71, %p72
      %p74 = scmp.ne.s32.totalorder %s66, %s69
      %p75 = scmp.eq.s32.totalorder %s9, 0
      %p76 = por %p74, %p75
      %p77 = scmp.ne.s32.totalorder %s66, %s69
      %p78 = scmp.eq.s32.totalorder %s14, 1
      %p79 = por %p77, %p78
      %p80 = scmp.ne.s32.totalorder %s69, %s70
      %p81 = scmp.eq.s32.totalorder %s14, 0
      %p82 = por %p80, %p81
      %p83 = scmp.ne.s32.totalorder %s69, %s70
      %p84 = scmp.eq.s32.totalorder %s15, 1
      %p85 = por %p83, %p84
      %p87 = scmp.ne.s32.totalorder %s70, %s86
      %p88 = scmp.eq.s32.totalorder %s15, 0
      %p89 = por %p87, %p88
      %p90 = scmp.le.s32.totalorder 1, %s9
      %p91 = scmp.lt.s32.totalorder %s9, 3
      %p92 = pnand %p90, %p91
      %p93 = pneg %p92
      // Predicated region
      $region9: #{wav2vec2_lora_cls_forward.1} parent=5 // pred_check
        _
      $region10: #{wav2vec2_lora_cls_forward.1} parent=5 // pred_check_branch
        %95 = sbr.rel (%p92) target = $region12
      $region11: #{wav2vec2_lora_cls_forward.1} parent=5 // pred_region
        %s96 = ssub.s32 %s9, 1
        // Predicated region
        $region13: #{wav2vec2_lora_cls_forward.1} parent=11 // pred_check
          %p97 = pneg %p56
        $region14: #{wav2vec2_lora_cls_forward.1} parent=11 // pred_check_branch
          %99 = sbr.rel (%p97) target = $region16
        $region15: #{wav2vec2_lora_cls_forward.1} parent=11 // pred_region
          %s101 = ssub.s32 5632, 5632
          %102 = vsyncadd [#allocation3], %s101
          %s103 = sshll.u32 [#allocation2], 4
          %s104 = int_to_ptr.vmem [resolvable:$true] %s103
          %109 = dma.hbm_to_vmem [thread:$0]  %s1, 5632, %s104, [#allocation3], 128, 128, 8
        $region16: #{wav2vec2_lora_cls_forward.1} parent=11 // pred_fallthru
          _
      $region12: #{wav2vec2_lora_cls_forward.1} parent=5 // pred_fallthru
        _
      %p110 = scmp.lt.s32.totalorder %s9, 2
      // Predicated region
      $region17: #{wav2vec2_lora_cls_forward.1} parent=5 // pred_check
        %p111 = pneg %p110
      $region18: #{wav2vec2_lora_cls_forward.1} parent=5 // pred_check_branch
        %113 = sbr.rel (%p111) target = $region20
      $region19: #{wav2vec2_lora_cls_forward.1} parent=5 // pred_region
        // Predicated region
        $region21: #{wav2vec2_lora_cls_forward.1} parent=19 // pred_check
          %p114 = pneg %p29
        $region22: #{wav2vec2_lora_cls_forward.1} parent=19 // pred_check_branch
          %116 = sbr.rel (%p114) target = $region24
        $region23: #{wav2vec2_lora_cls_forward.1} parent=19 // pred_region
          %p117 = scmp.lt.s32.totalorder %s9, 1
          %s118 = scalar_select %p117, %s9, 1
          %s119 = smul.addr %s118, 8
          %s120 = smul.addr %s119, 8
          %s121 = scalar_lea.vmem %s0, %s120
        $region24: #{wav2vec2_lora_cls_forward.1} parent=19 // pred_fallthru
          _
      $region20: #{wav2vec2_lora_cls_forward.1} parent=5 // pred_fallthru
        _
      %p122 = scmp.le.s32.totalorder 1, %s9
      %p123 = scmp.lt.s32.totalorder %s9, 3
      %p124 = pnand %p122, %p123
      %p125 = pneg %p124
      // Predicated region
      $region25: #{wav2vec2_lora_cls_forward.1} parent=5 // pred_check
        _
      $region26: #{wav2vec2_lora_cls_forward.1} parent=5 // pred_check_branch
        %127 = sbr.rel (%p124) target = $region28
      $region27: #{wav2vec2_lora_cls_forward.1} parent=5 // pred_region
        %s128 = ssub.s32 %s9, 1
        // Predicated region
        $region29: #{wav2vec2_lora_cls_forward.1} parent=27 // pred_check
          %p129 = pneg %p56
        $region30: #{wav2vec2_lora_cls_forward.1} parent=27 // pred_check_branch
          %131 = sbr.rel (%p129) target = $region32
        $region31: #{wav2vec2_lora_cls_forward.1} parent=27 // pred_region
          %132 = dma.done [#allocation3], 5632
        $region32: #{wav2vec2_lora_cls_forward.1} parent=27 // pred_fallthru
          _
        %p133 = scmp.lt.s32.totalorder %s14, 1
        %s134 = scalar_select %p133, %s14, 1
        %s135 = smul.addr %s134, 8
        %s136 = smul.addr %s135, 8
        %s137 = scalar_lea.vmem %s0, %s136
        %p138 = pneg %p35
        %p139 = pneg %p32
        %p140 = pneg %p56
        %p141 = pneg %p53
        %p142 = pneg %p82
        %p143 = pneg %p79
        %p144 = scmp.lt.s32.totalorder %s14, 1
        %s145 = scalar_select %p144, %s14, 1
        %s146 = smul.addr %s145, 8
        %s147 = scalar_lea.vmem %s2, %s146
        %p148 = scmp.lt.s32.totalorder %s14, 1
        %s149 = scalar_select %p148, %s14, 1
        %s150 = smul.addr %s149, 8
        %s151 = smul.addr %s150, 8
        %s152 = scalar_lea.vmem %s0, %s151
        %p153 = scmp.lt.s32.totalorder %s14, 1
        %s154 = scalar_select %p153, %s14, 1
        %s155 = smul.addr %s154, 8
        %s156 = scalar_lea.vmem %s2, %s155
        %v157 = vld [vmem:[#allocation2] sm:$0xff]
        %v158 = vld [vmem:[#allocation2 + $0x8] sm:$0xff]
        %v159 = vld [vmem:[#allocation2 + $0x10] sm:$0xff]
        %v160 = vld [vmem:[#allocation2 + $0x18] sm:$0xff]
        %v161 = vld [vmem:[#allocation2 + $0x20] sm:$0xff]
        %v162 = vld [vmem:[#allocation2 + $0x28] sm:$0xff]
        %v163 = vld [vmem:[#allocation2 + $0x30] sm:$0xff]
        %v164 = vld [vmem:[#allocation2 + $0x38] sm:$0xff]
        %v165 = vld [vmem:[#allocation2 + $0x40] sm:$0xff]
        %v166 = vld [vmem:[#allocation2 + $0x48] sm:$0xff]
        %v167 = vld [vmem:[#allocation2 + $0x50] sm:$0xff]
        %v168 = vld [vmem:[#allocation2 + $0x58] sm:$0xff]
        %v169 = vld [vmem:[#allocation2 + $0x60] sm:$0xff]
        %v170 = vld [vmem:[#allocation2 + $0x68] sm:$0xff]
        %v171 = vld [vmem:[#allocation2 + $0x70] sm:$0xff]
        %v172 = vld [vmem:[#allocation2 + $0x78] sm:$0xff]
        %v173 = vld [vmem:[#allocation2 + $0x80] sm:$0xff]
        %v174 = vld [vmem:[#allocation2 + $0x88] sm:$0xff]
        %v175 = vld [vmem:[#allocation2 + $0x90] sm:$0xff]
        %v176 = vld [vmem:[#allocation2 + $0x98] sm:$0xff]
        %v177 = vld [vmem:[#allocation2 + $0xa0] sm:$0xff]
        %v178 = vld [vmem:[#allocation2 + $0xa8] sm:$0xff]
        %v179 = vld [vmem:[#allocation2 + $0xb0] sm:$0xff]
        %v180 = vld [vmem:[#allocation2 + $0xb8] sm:$0xff]
        %v181 = vld [vmem:[#allocation2 + $0xc0] sm:$0xff]
        %v182 = vld [vmem:[#allocation2 + $0xc8] sm:$0xff]
        %v183 = vld [vmem:[#allocation2 + $0xd0] sm:$0xff]
        %v184 = vld [vmem:[#allocation2 + $0xd8] sm:$0xff]
        %v185 = vld [vmem:[#allocation2 + $0xe0] sm:$0xff]
        %v186 = vld [vmem:[#allocation2 + $0xe8] sm:$0xff]
        %v187 = vld [vmem:[#allocation2 + $0xf0] sm:$0xff]
        %v188 = vld [vmem:[#allocation2 + $0xf8] sm:$0xff]
        %v189 = vld [vmem:[#allocation2 + $0x100] sm:$0xff]
        %v190 = vld [vmem:[#allocation2 + $0x108] sm:$0xff]
        %v191 = vld [vmem:[#allocation2 + $0x110] sm:$0xff]
        %v192 = vld [vmem:[#allocation2 + $0x118] sm:$0xff]
        %v193 = vld [vmem:[#allocation2 + $0x120] sm:$0xff]
        %v194 = vld [vmem:[#allocation2 + $0x128] sm:$0xff]
        %v195 = vld [vmem:[#allocation2 + $0x130] sm:$0xff]
        %v196 = vld [vmem:[#allocation2 + $0x138] sm:$0xff]
        %v197 = vld [vmem:[#allocation2 + $0x140] sm:$0xff]
        %v198 = vld [vmem:[#allocation2 + $0x148] sm:$0xff]
        %v199 = vld [vmem:[#allocation2 + $0x150] sm:$0x1]
        %v200 = vld [vmem:[#allocation2 + $0x151] sm:$0x1]
        %v201 = vld [vmem:[#allocation2 + $0x152] sm:$0x1]
        %v202 = vld [vmem:[#allocation2 + $0x153] sm:$0x1]
        %v203 = vld [vmem:[#allocation2 + $0x154] sm:$0x1]
        %v204 = vld [vmem:[#allocation2 + $0x155] sm:$0x1]
        %v205 = vld [vmem:[#allocation2 + $0x156] sm:$0x1]
        %v206 = vld [vmem:[#allocation2 + $0x157] sm:$0x1]
        %v207 = vld [vmem:[#allocation2 + $0x158] sm:$0x1]
        %v208 = vld [vmem:[#allocation2 + $0x159] sm:$0x1]
        %v209 = vld [vmem:[#allocation2 + $0x15a] sm:$0x1]
        %v210 = vld [vmem:[#allocation2 + $0x15b] sm:$0x1]
        %v211 = vld [vmem:[%s152] sm:$0xff]
        %v212 = vld [vmem:[%s152 + $0x8] sm:$0xff]
        %v213 = vld [vmem:[%s152 + $0x10] sm:$0xff]
        %v214 = vld [vmem:[%s152 + $0x18] sm:$0xff]
        %v215 = vld [vmem:[%s152 + $0x20] sm:$0xff]
        %v216 = vld [vmem:[%s152 + $0x28] sm:$0xff]
        %v217 = vld [vmem:[%s152 + $0x30] sm:$0xff]
        %v218 = vld [vmem:[%s152 + $0x38] sm:$0xff]
        %v219 = vlaneseq
        %v220 = vshrl.u32 %v219, 7
        %v221 = vsub.s32 0, %v220
        %v222 = vrot.slane %v199, %v221
        %vm223 = vcmask 130048
        %v225 = vsel %vm223, %v211, 0
        %v228 = vsel %vm223, %v212, 0
        %v231 = vsel %vm223, %v213, 0
        %v234 = vsel %vm223, %v214, 0
        %v237 = vsel %vm223, %v215, 0
        %v240 = vsel %vm223, %v216, 0
        %v243 = vsel %vm223, %v217, 0
        %v246 = vsel %vm223, %v218, 0
        %248 = vmatprep.subr.mxu0 0.0
        %249 = vmatpush1.msra.mxu0 %v157
        %250 = vmatprep.subr.mxu0 0.0
        %251 = vmatpush1.msra.mxu0 %v158
        %252 = vmatprep.subr.mxu0 0.0
        %253 = vmatpush1.msra.mxu0 0.0
        %254 = vmatprep.subr.mxu0 0.0
        %255 = vmatpush1.msra.mxu0 0.0
        %256 = vmatprep.subr.mxu0 0.0
        %257 = vmatpush1.msra.mxu0 0.0
        %258 = vmatprep.subr.mxu0 0.0
        %259 = vmatpush1.msra.mxu0 0.0
        %260 = vmatprep.subr.mxu0 0.0
        %261 = vmatpush1.msra.mxu0 0.0
        %262 = vmatprep.subr.mxu0 0.0
        %263 = vmatpush1.msra.mxu0 0.0
        %264 = vmatprep.subr.mxu0 0.0
        %265 = vmatpush1.msra.mxu0 0.0
        %266 = vmatprep.subr.mxu0 0.0
        %267 = vmatpush1.msra.mxu0 0.0
        %268 = vmatprep.subr.mxu0 0.0
        %269 = vmatpush1.msra.mxu0 0.0
        %270 = vmatprep.subr.mxu0 0.0
        %271 = vmatpush1.msra.mxu0 0.0
        %272 = vmatprep.subr.mxu0 0.0
        %273 = vmatpush1.msra.mxu0 0.0
        %274 = vmatprep.subr.mxu0 0.0
        %275 = vmatpush1.msra.mxu0 0.0
        %276 = vmatprep.subr.mxu0 0.0
        %277 = vmatpush1.msra.mxu0 0.0
        %278 = vmatprep.subr.mxu0 0.0
        %279 = vmatpush1.msra.mxu0 0.0
        %280 = vmatprep.subr.mxu0 0.0
        %281 = vmatpush1.msra.mxu0 0.0
        %282 = vmatprep.subr.mxu0 0.0
        %283 = vmatpush1.msra.mxu0 0.0
        %284 = vmatprep.subr.mxu0 0.0
        %285 = vmatpush1.msra.mxu0 0.0
        %286 = vmatprep.subr.mxu0 0.0
        %287 = vmatpush1.msra.mxu0 0.0
        %288 = vmatprep.subr.mxu0 0.0
        %289 = vmatpush1.msra.mxu0 0.0
        %290 = vmatprep.subr.mxu0 0.0
        %291 = vmatpush1.msra.mxu0 0.0
        %292 = vmatprep.subr.mxu0 0.0
        %293 = vmatpush1.msra.mxu0 0.0
        %294 = vmatprep.subr.mxu0 0.0
        %295 = vmatpush1.msra.mxu0 0.0
        %296 = vmatprep.subr.mxu0 0.0
        %297 = vmatpush1.msra.mxu0 0.0
        %298 = vmatprep.subr.mxu0 0.0
        %299 = vmatpush1.msra.mxu0 0.0
        %300 = vmatprep.subr.mxu0 0.0
        %301 = vmatpush1.msra.mxu0 0.0
        %302 = vmatprep.subr.mxu0 0.0
        %303 = vmatpush1.msra.mxu0 0.0
        %304 = vmatprep.subr.mxu0 0.0
        %305 = vmatpush1.msra.mxu0 0.0
        %306 = vmatprep.subr.mxu0 0.0
        %307 = vmatpush1.msra.mxu0 0.0
        %308 = vmatprep.subr.mxu0 0.0
        %309 = vmatpush1.msra.mxu0 0.0
        %310 = vmatprep.subr.mxu0 0.0
        %311 = vmatpush1.msra.mxu0 0.0
        %312 = vmatprep.mubr.f32.mxu0 0.0
        %313 = vmatmul.mubr.f32.gmra.mrb[0].mxu0 %v225
        %v314 = vpop.f32.mrb[0].mxu0
        %v315 = vadd.f32 %v222, %v314
        %v316 = vpop.f32.mrb[0].mxu0
        %317 = vmatprep.mubr.f32.mxu0 0.0
        %318 = vmatmul.mubr.f32.gmra.mrb[0].mxu0 %v228
        %v319 = vpop.f32.mrb[0].mxu0
        %v320 = vadd.f32 %v222, %v319
        %v321 = vpop.f32.mrb[0].mxu0
        %322 = vmatprep.mubr.f32.mxu0 0.0
        %323 = vmatmul.mubr.f32.gmra.mrb[0].mxu0 %v231
        %v324 = vpop.f32.mrb[0].mxu0
        %v325 = vadd.f32 %v222, %v324
        %v326 = vpop.f32.mrb[0].mxu0
        %327 = vmatprep.mubr.f32.mxu0 0.0
        %328 = vmatmul.mubr.f32.gmra.mrb[0].mxu0 %v234
        %v329 = vpop.f32.mrb[0].mxu0
        %v330 = vadd.f32 %v222, %v329
        %v331 = vpop.f32.mrb[0].mxu0
        %332 = vmatprep.mubr.f32.mxu0 0.0
        %333 = vmatmul.mubr.f32.gmra.mrb[0].mxu0 %v237
        %v334 = vpop.f32.mrb[0].mxu0
        %v335 = vadd.f32 %v222, %v334
        %v336 = vpop.f32.mrb[0].mxu0
        %337 = vmatprep.mubr.f32.mxu0 0.0
        %338 = vmatmul.mubr.f32.gmra.mrb[0].mxu0 %v240
        %v339 = vpop.f32.mrb[0].mxu0
        %v340 = vadd.f32 %v222, %v339
        %v341 = vpop.f32.mrb[0].mxu0
        %342 = vmatprep.mubr.f32.mxu0 0.0
        %343 = vmatmul.mubr.f32.gmra.mrb[0].mxu0 %v243
        %v344 = vpop.f32.mrb[0].mxu0
        %v345 = vadd.f32 %v222, %v344
        %v346 = vpop.f32.mrb[0].mxu0
        %347 = vmatprep.mubr.f32.mxu0 0.0
        %348 = vmatmul.mubr.f32.gmra.mrb[0].mxu0 %v246
        %v349 = vpop.f32.mrb[0].mxu0
        %v350 = vadd.f32 %v222, %v349
        %v351 = vpop.f32.mrb[0].mxu0
        %352 = vdwg.mxu0
        %v353 = vmul.f32 %v315, %v315
        %v354 = vmul.f32 %v320, %v320
        %v355 = vmul.f32 %v325, %v325
        %v356 = vmul.f32 %v330, %v330
        %v357 = vmul.f32 %v335, %v335
        %v358 = vmul.f32 %v340, %v340
        %v359 = vmul.f32 %v345, %v345
        %v360 = vmul.f32 %v350, %v350
        %v361 = vmul.f32 %v315, %v353
        %v362 = vmul.f32 %v320, %v354
        %v363 = vmul.f32 %v325, %v355
        %v364 = vmul.f32 %v330, %v356
        %v365 = vmul.f32 %v335, %v357
        %v366 = vmul.f32 %v340, %v358
        %v367 = vmul.f32 %v345, %v359
        %v368 = vmul.f32 %v350, %v360
        %v369 = vmul.f32 %v361, 0.044715
        %v370 = vmul.f32 %v362, 0.044715
        %v371 = vmul.f32 %v363, 0.044715
        %v372 = vmul.f32 %v364, 0.044715
        %v373 = vmul.f32 %v365, 0.044715
        %v374 = vmul.f32 %v366, 0.044715
        %v375 = vmul.f32 %v367, 0.044715
        %v376 = vmul.f32 %v368, 0.044715
        %v377 = vadd.f32 %v315, %v369
        %v378 = vadd.f32 %v320, %v370
        %v379 = vadd.f32 %v325, %v371
        %v380 = vadd.f32 %v330, %v372
        %v381 = vadd.f32 %v335, %v373
        %v382 = vadd.f32 %v340, %v374
        %v383 = vadd.f32 %v345, %v375
        %v384 = vadd.f32 %v350, %v376
        %v385 = vmul.f32 %v377, 0.7978846
        %v386 = vmul.f32 %v378, 0.7978846
        %v387 = vmul.f32 %v379, 0.7978846
        %v388 = vmul.f32 %v380, 0.7978846
        %v389 = vmul.f32 %v381, 0.7978846
        %v390 = vmul.f32 %v382, 0.7978846
        %v391 = vmul.f32 %v383, 0.7978846
        %v392 = vmul.f32 %v384, 0.7978846
        %v393 = vtanh.pop %v385
        %v394 = vtanh.pop %v386
        %v395 = vtanh.pop %v387
        %v396 = vtanh.pop %v388
        %v397 = vtanh.pop %v389
        %v398 = vtanh.pop %v390
        %v399 = vtanh.pop %v391
        %v400 = vtanh.pop %v392
        %v401 = vadd.f32 %v393, 1.0
        %v402 = vadd.f32 %v394, 1.0
        %v403 = vadd.f32 %v395, 1.0
        %v404 = vadd.f32 %v396, 1.0
        %v405 = vadd.f32 %v397, 1.0
        %v406 = vadd.f32 %v398, 1.0
        %v407 = vadd.f32 %v399, 1.0
        %v408 = vadd.f32 %v400, 1.0
        %v409 = vmul.f32 %v401, 0.5
        %v410 = vmul.f32 %v402, 0.5
        %v411 = vmul.f32 %v403, 0.5
        %v412 = vmul.f32 %v404, 0.5
        %v413 = vmul.f32 %v405, 0.5
        %v414 = vmul.f32 %v406, 0.5
        %v415 = vmul.f32 %v407, 0.5
        %v416 = vmul.f32 %v408, 0.5
        %v417 = vmul.f32 %v315, %v409
        %v418 = vmul.f32 %v320, %v410
        %v419 = vmul.f32 %v325, %v411
        %v420 = vmul.f32 %v330, %v412
        %v421 = vmul.f32 %v335, %v413
        %v422 = vmul.f32 %v340, %v414
        %v423 = vmul.f32 %v345, %v415
        %v424 = vmul.f32 %v350, %v416
        %vm425 = vcmask 261120
        %v426 = vsel %vm425, %v417, 0.0
        %427 = vadd.xlane.f32.xlu0 %v426
        %v428 = vpop.xlane.xlu0 %427
        %v429 = vsel %vm425, %v418, 0.0
        %430 = vadd.xlane.f32.xlu0 %v429
        %v431 = vpop.xlane.xlu0 %430
        %v432 = vsel %vm425, %v419, 0.0
        %433 = vadd.xlane.f32.xlu0 %v432
        %v434 = vpop.xlane.xlu0 %433
        %v435 = vsel %vm425, %v420, 0.0
        %436 = vadd.xlane.f32.xlu0 %v435
        %v437 = vpop.xlane.xlu0 %436
        %v438 = vsel %vm425, %v421, 0.0
        %439 = vadd.xlane.f32.xlu0 %v438
        %v440 = vpop.xlane.xlu0 %439
        %v441 = vsel %vm425, %v422, 0.0
        %442 = vadd.xlane.f32.xlu0 %v441
        %v443 = vpop.xlane.xlu0 %442
        %v444 = vsel %vm425, %v423, 0.0
        %445 = vadd.xlane.f32.xlu0 %v444
        %v446 = vpop.xlane.xlu0 %445
        %v447 = vsel %vm425, %v424, 0.0
        %448 = vadd.xlane.f32.xlu0 %v447
        %v449 = vpop.xlane.xlu0 %448
        %v450 = vrcp.pop 32.0
        %v451 = vmul.f32 %v428, %v450
        %v452 = vmul.f32 %v431, %v450
        %v453 = vmul.f32 %v434, %v450
        %v454 = vmul.f32 %v437, %v450
        %v455 = vmul.f32 %v440, %v450
        %v456 = vmul.f32 %v443, %v450
        %v457 = vmul.f32 %v446, %v450
        %v458 = vmul.f32 %v449, %v450
        %v459 = vsub.f32 %v417, %v451
        %v460 = vsub.f32 %v418, %v452
        %v461 = vsub.f32 %v419, %v453
        %v462 = vsub.f32 %v420, %v454
        %v463 = vsub.f32 %v421, %v455
        %v464 = vsub.f32 %v422, %v456
        %v465 = vsub.f32 %v423, %v457
        %v466 = vsub.f32 %v424, %v458
        %v467 = vmul.f32 %v459, %v459
        %v468 = vmul.f32 %v460, %v460
        %v469 = vmul.f32 %v461, %v461
        %v470 = vmul.f32 %v462, %v462
        %v471 = vmul.f32 %v463, %v463
        %v472 = vmul.f32 %v464, %v464
        %v473 = vmul.f32 %v465, %v465
        %v474 = vmul.f32 %v466, %v466
        %v475 = vsel %vm425, %v467, 0.0
        %476 = vadd.xlane.f32.xlu0 %v475
        %v477 = vpop.xlane.xlu0 %476
        %v478 = vsel %vm425, %v468, 0.0
        %479 = vadd.xlane.f32.xlu0 %v478
        %v480 = vpop.xlane.xlu0 %479
        %v481 = vsel %vm425, %v469, 0.0
        %482 = vadd.xlane.f32.xlu0 %v481
        %v483 = vpop.xlane.xlu0 %482
        %v484 = vsel %vm425, %v470, 0.0
        %485 = vadd.xlane.f32.xlu0 %v484
        %v486 = vpop.xlane.xlu0 %485
        %v487 = vsel %vm425, %v471, 0.0
        %488 = vadd.xlane.f32.xlu0 %v487
        %v489 = vpop.xlane.xlu0 %488
        %v490 = vsel %vm425, %v472, 0.0
        %491 = vadd.xlane.f32.xlu0 %v490
        %v492 = vpop.xlane.xlu0 %491
        %v493 = vsel %vm425, %v473, 0.0
        %494 = vadd.xlane.f32.xlu0 %v493
        %v495 = vpop.xlane.xlu0 %494
        %v496 = vsel %vm425, %v474, 0.0
        %497 = vadd.xlane.f32.xlu0 %v496
        %v498 = vpop.xlane.xlu0 %497
        %v499 = vmul.f32 %v477, %v450
        %v500 = vmul.f32 %v480, %v450
        %v501 = vmul.f32 %v483, %v450
        %v502 = vmul.f32 %v486, %v450
        %v503 = vmul.f32 %v489, %v450
        %v504 = vmul.f32 %v492, %v450
        %v505 = vmul.f32 %v495, %v450
        %v506 = vmul.f32 %v498, %v450
        %v507 = vadd.f32 %v499, 1e-05
        %v508 = vadd.f32 %v500, 1e-05
        %v509 = vadd.f32 %v501, 1e-05
        %v510 = vadd.f32 %v502, 1e-05
        %v511 = vadd.f32 %v503, 1e-05
        %v512 = vadd.f32 %v504, 1e-05
        %v513 = vadd.f32 %v505, 1e-05
        %v514 = vadd.f32 %v506, 1e-05
        %v515 = vrsqrt.pop %v507
        %v516 = vrsqrt.pop %v508
        %v517 = vrsqrt.pop %v509
        %v518 = vrsqrt.pop %v510
        %v519 = vrsqrt.pop %v511
        %v520 = vrsqrt.pop %v512
        %v521 = vrsqrt.pop %v513
        %v522 = vrsqrt.pop %v514
        %v523 = vmul.f32 %v459, %v515
        %v524 = vmul.f32 %v460, %v516
        %v525 = vmul.f32 %v461, %v517
        %v526 = vmul.f32 %v462, %v518
        %v527 = vmul.f32 %v463, %v519
        %v528 = vmul.f32 %v464, %v520
        %v529 = vmul.f32 %v465, %v521
        %v530 = vmul.f32 %v466, %v522
        %v531 = vlaneseq
        %v532 = vshrl.u32 %v531, 7
        %v533 = vsub.s32 0, %v532
        %v534 = vrot.slane %v200, %v533
        %v535 = vmul.f32 %v523, %v534
        %v536 = vmul.f32 %v524, %v534
        %v537 = vmul.f32 %v525, %v534
        %v538 = vmul.f32 %v526, %v534
        %v539 = vmul.f32 %v527, %v534
        %v540 = vmul.f32 %v528, %v534
        %v541 = vmul.f32 %v529, %v534
        %v542 = vmul.f32 %v530, %v534
        %v543 = vlaneseq
        %v544 = vshrl.u32 %v543, 7
        %v545 = vsub.s32 0, %v544
        %v546 = vrot.slane %v201, %v545
        %v547 = vadd.f32 %v535, %v546
        %v548 = vadd.f32 %v536, %v546
        %v549 = vadd.f32 %v537, %v546
        %v550 = vadd.f32 %v538, %v546
        %v551 = vadd.f32 %v539, %v546
        %v552 = vadd.f32 %v540, %v546
        %v553 = vadd.f32 %v541, %v546
        %v554 = vadd.f32 %v542, %v546
        %v555 = vlaneseq
        %v556 = vshrl.u32 %v555, 7
        %v557 = vsub.s32 0, %v556
        %v558 = vrot.slane %v202, %v557
        %v560 = vsel %vm425, %v547, 0
        %v563 = vsel %vm425, %v548, 0
        %v566 = vsel %vm425, %v549, 0
        %v569 = vsel %vm425, %v550, 0
        %v572 = vsel %vm425, %v551, 0
        %v575 = vsel %vm425, %v552, 0
        %v578 = vsel %vm425, %v553, 0
        %v581 = vsel %vm425, %v554, 0
        %583 = vmatprep.subr.mxu0 0.0
        %584 = vmatpush1.msra.mxu0 %v159
        %585 = vmatprep.subr.mxu0 0.0
        %586 = vmatpush1.msra.mxu0 %v160
        %587 = vmatprep.subr.mxu0 0.0
        %588 = vmatpush1.msra.mxu0 %v161
        %589 = vmatprep.subr.mxu0 0.0
        %590 = vmatpush1.msra.mxu0 %v162
        %591 = vmatprep.subr.mxu0 0.0
        %592 = vmatpush1.msra.mxu0 0.0
        %593 = vmatprep.subr.mxu0 0.0
        %594 = vmatpush1.msra.mxu0 0.0
        %595 = vmatprep.subr.mxu0 0.0
        %596 = vmatpush1.msra.mxu0 0.0
        %597 = vmatprep.subr.mxu0 0.0
        %598 = vmatpush1.msra.mxu0 0.0
        %599 = vmatprep.subr.mxu0 0.0
        %600 = vmatpush1.msra.mxu0 0.0
        %601 = vmatprep.subr.mxu0 0.0
        %602 = vmatpush1.msra.mxu0 0.0
        %603 = vmatprep.subr.mxu0 0.0
        %604 = vmatpush1.msra.mxu0 0.0
        %605 = vmatprep.subr.mxu0 0.0
        %606 = vmatpush1.msra.mxu0 0.0
        %607 = vmatprep.subr.mxu0 0.0
        %608 = vmatpush1.msra.mxu0 0.0
        %609 = vmatprep.subr.mxu0 0.0
        %610 = vmatpush1.msra.mxu0 0.0
        %611 = vmatprep.subr.mxu0 0.0
        %612 = vmatpush1.msra.mxu0 0.0
        %613 = vmatprep.subr.mxu0 0.0
        %614 = vmatpush1.msra.mxu0 0.0
        %615 = vmatprep.subr.mxu0 0.0
        %616 = vmatpush1.msra.mxu0 0.0
        %617 = vmatprep.subr.mxu0 0.0
        %618 = vmatpush1.msra.mxu0 0.0
        %619 = vmatprep.subr.mxu0 0.0
        %620 = vmatpush1.msra.mxu0 0.0
        %621 = vmatprep.subr.mxu0 0.0
        %622 = vmatpush1.msra.mxu0 0.0
        %623 = vmatprep.subr.mxu0 0.0
        %624 = vmatpush1.msra.mxu0 0.0
        %625 = vmatprep.subr.mxu0 0.0
        %626 = vmatpush1.msra.mxu0 0.0
        %627 = vmatprep.subr.mxu0 0.0
        %628 = vmatpush1.msra.mxu0 0.0
        %629 = vmatprep.subr.mxu0 0.0
        %630 = vmatpush1.msra.mxu0 0.0
        %631 = vmatprep.subr.mxu0 0.0
        %632 = vmatpush1.msra.mxu0 0.0
        %633 = vmatprep.subr.mxu0 0.0
        %634 = vmatpush1.msra.mxu0 0.0
        %635 = vmatprep.subr.mxu0 0.0
        %636 = vmatpush1.msra.mxu0 0.0
        %637 = vmatprep.subr.mxu0 0.0
        %638 = vmatpush1.msra.mxu0 0.0
        %639 = vmatprep.subr.mxu0 0.0
        %640 = vmatpush1.msra.mxu0 0.0
        %641 = vmatprep.subr.mxu0 0.0
        %642 = vmatpush1.msra.mxu0 0.0
        %643 = vmatprep.subr.mxu0 0.0
        %644 = vmatpush1.msra.mxu0 0.0
        %645 = vmatprep.subr.mxu0 0.0
        %646 = vmatpush1.msra.mxu0 0.0
        %647 = vmatprep.mubr.f32.mxu0 0.0
        %648 = vmatmul.mubr.f32.gmra.mrb[0].mxu0 %v560
        %v649 = vpop.f32.mrb[0].mxu0
        %v650 = vadd.f32 %v558, %v649
        %v651 = vpop.f32.mrb[0].mxu0
        %652 = vmatprep.mubr.f32.mxu0 0.0
        %653 = vmatmul.mubr.f32.gmra.mrb[0].mxu0 %v563
        %v654 = vpop.f32.mrb[0].mxu0
        %v655 = vadd.f32 %v558, %v654
        %v656 = vpop.f32.mrb[0].mxu0
        %657 = vmatprep.mubr.f32.mxu0 0.0
        %658 = vmatmul.mubr.f32.gmra.mrb[0].mxu0 %v566
        %v659 = vpop.f32.mrb[0].mxu0
        %v660 = vadd.f32 %v558, %v659
        %v661 = vpop.f32.mrb[0].mxu0
        %662 = vmatprep.mubr.f32.mxu0 0.0
        %663 = vmatmul.mubr.f32.gmra.mrb[0].mxu0 %v569
        %v664 = vpop.f32.mrb[0].mxu0
        %v665 = vadd.f32 %v558, %v664
        %v666 = vpop.f32.mrb[0].mxu0
        %667 = vmatprep.mubr.f32.mxu0 0.0
        %668 = vmatmul.mubr.f32.gmra.mrb[0].mxu0 %v572
        %v669 = vpop.f32.mrb[0].mxu0
        %v670 = vadd.f32 %v558, %v669
        %v671 = vpop.f32.mrb[0].mxu0
        %672 = vmatprep.mubr.f32.mxu0 0.0
        %673 = vmatmul.mubr.f32.gmra.mrb[0].mxu0 %v575
        %v674 = vpop.f32.mrb[0].mxu0
        %v675 = vadd.f32 %v558, %v674
        %v676 = vpop.f32.mrb[0].mxu0
        %677 = vmatprep.mubr.f32.mxu0 0.0
        %678 = vmatmul.mubr.f32.gmra.mrb[0].mxu0 %v578
        %v679 = vpop.f32.mrb[0].mxu0
        %v680 = vadd.f32 %v558, %v679
        %v681 = vpop.f32.mrb[0].mxu0
        %682 = vmatprep.mubr.f32.mxu0 0.0
        %683 = vmatmul.mubr.f32.gmra.mrb[0].mxu0 %v581
        %v684 = vpop.f32.mrb[0].mxu0
        %v685 = vadd.f32 %v558, %v684
        %v686 = vpop.f32.mrb[0].mxu0
        %687 = vdwg.mxu0
        %v688 = vlaneseq
        %v689 = vshrl.u32 %v688, 7
        %v690 = vsub.s32 0, %v689
        %v691 = vrot.slane %v203, %v690
        %692 = vmatprep.subr.mxu0 0.0
        %693 = vmatpush1.msra.mxu0 %v163
        %694 = vmatprep.subr.mxu0 0.0
        %695 = vmatpush1.msra.mxu0 %v164
        %696 = vmatprep.subr.mxu0 0.0
        %697 = vmatpush1.msra.mxu0 %v165
        %698 = vmatprep.subr.mxu0 0.0
        %699 = vmatpush1.msra.mxu0 %v166
        %700 = vmatprep.subr.mxu0 0.0
        %701 = vmatpush1.msra.mxu0 0.0
        %702 = vmatprep.subr.mxu0 0.0
        %703 = vmatpush1.msra.mxu0 0.0
        %704 = vmatprep.subr.mxu0 0.0
        %705 = vmatpush1.msra.mxu0 0.0
        %706 = vmatprep.subr.mxu0 0.0
        %707 = vmatpush1.msra.mxu0 0.0
        %708 = vmatprep.subr.mxu0 0.0
        %709 = vmatpush1.msra.mxu0 0.0
        %710 = vmatprep.subr.mxu0 0.0
        %711 = vmatpush1.msra.mxu0 0.0
        %712 = vmatprep.subr.mxu0 0.0
        %713 = vmatpush1.msra.mxu0 0.0
        %714 = vmatprep.subr.mxu0 0.0
        %715 = vmatpush1.msra.mxu0 0.0
        %716 = vmatprep.subr.mxu0 0.0
        %717 = vmatpush1.msra.mxu0 0.0
        %718 = vmatprep.subr.mxu0 0.0
        %719 = vmatpush1.msra.mxu0 0.0
        %720 = vmatprep.subr.mxu0 0.0
        %721 = vmatpush1.msra.mxu0 0.0
        %722 = vmatprep.subr.mxu0 0.0
        %723 = vmatpush1.msra.mxu0 0.0
        %724 = vmatprep.subr.mxu0 0.0
        %725 = vmatpush1.msra.mxu0 0.0
        %726 = vmatprep.subr.mxu0 0.0
        %727 = vmatpush1.msra.mxu0 0.0
        %728 = vmatprep.subr.mxu0 0.0
        %729 = vmatpush1.msra.mxu0 0.0
        %730 = vmatprep.subr.mxu0 0.0
        %731 = vmatpush1.msra.mxu0 0.0
        %732 = vmatprep.subr.mxu0 0.0
        %733 = vmatpush1.msra.mxu0 0.0
        %734 = vmatprep.subr.mxu0 0.0
        %735 = vmatpush1.msra.mxu0 0.0
        %736 = vmatprep.subr.mxu0 0.0
        %737 = vmatpush1.msra.mxu0 0.0
        %738 = vmatprep.subr.mxu0 0.0
        %739 = vmatpush1.msra.mxu0 0.0
        %740 = vmatprep.subr.mxu0 0.0
        %741 = vmatpush1.msra.mxu0 0.0
        %742 = vmatprep.subr.mxu0 0.0
        %743 = vmatpush1.msra.mxu0 0.0
        %744 = vmatprep.subr.mxu0 0.0
        %745 = vmatpush1.msra.mxu0 0.0
        %746 = vmatprep.subr.mxu0 0.0
        %747 = vmatpush1.msra.mxu0 0.0
        %748 = vmatprep.subr.mxu0 0.0
        %749 = vmatpush1.msra.mxu0 0.0
        %750 = vmatprep.subr.mxu0 0.0
        %751 = vmatpush1.msra.mxu0 0.0
        %752 = vmatprep.subr.mxu0 0.0
        %753 = vmatpush1.msra.mxu0 0.0
        %754 = vmatprep.subr.mxu0 0.0
        %755 = vmatpush1.msra.mxu0 0.0
        %756 = vmatprep.mubr.f32.mxu0 0.0
        %757 = vmatmul.mubr.f32.gmra.mrb[0].mxu0 %v560
        %v758 = vpop.f32.mrb[0].mxu0
        %v759 = vadd.f32 %v691, %v758
        %v760 = vpop.f32.mrb[0].mxu0
        %761 = vmatprep.mubr.f32.mxu0 0.0
        %762 = vmatmul.mubr.f32.gmra.mrb[0].mxu0 %v563
        %v763 = vpop.f32.mrb[0].mxu0
        %v764 = vadd.f32 %v691, %v763
        %v765 = vpop.f32.mrb[0].mxu0
        %766 = vmatprep.mubr.f32.mxu0 0.0
        %767 = vmatmul.mubr.f32.gmra.mrb[0].mxu0 %v566
        %v768 = vpop.f32.mrb[0].mxu0
        %v769 = vadd.f32 %v691, %v768
        %v770 = vpop.f32.mrb[0].mxu0
        %771 = vmatprep.mubr.f32.mxu0 0.0
        %772 = vmatmul.mubr.f32.gmra.mrb[0].mxu0 %v569
        %v773 = vpop.f32.mrb[0].mxu0
        %v774 = vadd.f32 %v691, %v773
        %v775 = vpop.f32.mrb[0].mxu0
        %776 = vmatprep.mubr.f32.mxu0 0.0
        %777 = vmatmul.mubr.f32.gmra.mrb[0].mxu0 %v572
        %v778 = vpop.f32.mrb[0].mxu0
        %v779 = vadd.f32 %v691, %v778
        %v780 = vpop.f32.mrb[0].mxu0
        %781 = vmatprep.mubr.f32.mxu0 0.0
        %782 = vmatmul.mubr.f32.gmra.mrb[0].mxu0 %v575
        %v783 = vpop.f32.mrb[0].mxu0
        %v784 = vadd.f32 %v691, %v783
        %v785 = vpop.f32.mrb[0].mxu0
        %786 = vmatprep.mubr.f32.mxu0 0.0
        %787 = vmatmul.mubr.f32.gmra.mrb[0].mxu0 %v578
        %v788 = vpop.f32.mrb[0].mxu0
        %v789 = vadd.f32 %v691, %v788
        %v790 = vpop.f32.mrb[0].mxu0
        %791 = vmatprep.mubr.f32.mxu0 0.0
        %792 = vmatmul.mubr.f32.gmra.mrb[0].mxu0 %v581
        %v793 = vpop.f32.mrb[0].mxu0
        %v794 = vadd.f32 %v691, %v793
        %v795 = vpop.f32.mrb[0].mxu0
        %796 = vdwg.mxu0
        %v797 = vlaneseq
        %v798 = vshrl.u32 %v797, 7
        %v799 = vsub.s32 0, %v798
        %v800 = vrot.slane %v204, %v799
        %801 = vmatprep.subr.mxu0 0.0
        %802 = vmatpush1.msra.mxu0 %v167
        %803 = vmatprep.subr.mxu0 0.0
        %804 = vmatpush1.msra.mxu0 %v168
        %805 = vmatprep.subr.mxu0 0.0
        %806 = vmatpush1.msra.mxu0 %v169
        %807 = vmatprep.subr.mxu0 0.0
        %808 = vmatpush1.msra.mxu0 %v170
        %809 = vmatprep.subr.mxu0 0.0
        %810 = vmatpush1.msra.mxu0 0.0
        %811 = vmatprep.subr.mxu0 0.0
        %812 = vmatpush1.msra.mxu0 0.0
        %813 = vmatprep.subr.mxu0 0.0
        %814 = vmatpush1.msra.mxu0 0.0
        %815 = vmatprep.subr.mxu0 0.0
        %816 = vmatpush1.msra.mxu0 0.0
        %817 = vmatprep.subr.mxu0 0.0
        %818 = vmatpush1.msra.mxu0 0.0
        %819 = vmatprep.subr.mxu0 0.0
        %820 = vmatpush1.msra.mxu0 0.0
        %821 = vmatprep.subr.mxu0 0.0
        %822 = vmatpush1.msra.mxu0 0.0
        %823 = vmatprep.subr.mxu0 0.0
        %824 = vmatpush1.msra.mxu0 0.0
        %825 = vmatprep.subr.mxu0 0.0
        %826 = vmatpush1.msra.mxu0 0.0
        %827 = vmatprep.subr.mxu0 0.0
        %828 = vmatpush1.msra.mxu0 0.0
        %829 = vmatprep.subr.mxu0 0.0
        %830 = vmatpush1.msra.mxu0 0.0
        %831 = vmatprep.subr.mxu0 0.0
        %832 = vmatpush1.msra.mxu0 0.0
        %833 = vmatprep.subr.mxu0 0.0
        %834 = vmatpush1.msra.mxu0 0.0
        %835 = vmatprep.subr.mxu0 0.0
        %836 = vmatpush1.msra.mxu0 0.0
        %837 = vmatprep.subr.mxu0 0.0
        %838 = vmatpush1.msra.mxu0 0.0
        %839 = vmatprep.subr.mxu0 0.0
        %840 = vmatpush1.msra.mxu0 0.0
        %841 = vmatprep.subr.mxu0 0.0
        %842 = vmatpush1.msra.mxu0 0.0
        %843 = vmatprep.subr.mxu0 0.0
        %844 = vmatpush1.msra.mxu0 0.0
        %845 = vmatprep.subr.mxu0 0.0
        %846 = vmatpush1.msra.mxu0 0.0
        %847 = vmatprep.subr.mxu0 0.0
        %848 = vmatpush1.msra.mxu0 0.0
        %849 = vmatprep.subr.mxu0 0.0
        %850 = vmatpush1.msra.mxu0 0.0
        %851 = vmatprep.subr.mxu0 0.0
        %852 = vmatpush1.msra.mxu0 0.0
        %853 = vmatprep.subr.mxu0 0.0
        %854 = vmatpush1.msra.mxu0 0.0
        %855 = vmatprep.subr.mxu0 0.0
        %856 = vmatpush1.msra.mxu0 0.0
        %857 = vmatprep.subr.mxu0 0.0
        %858 = vmatpush1.msra.mxu0 0.0
        %859 = vmatprep.subr.mxu0 0.0
        %860 = vmatpush1.msra.mxu0 0.0
        %861 = vmatprep.subr.mxu0 0.0
        %862 = vmatpush1.msra.mxu0 0.0
        %863 = vmatprep.subr.mxu0 0.0
        %864 = vmatpush1.msra.mxu0 0.0
        %865 = vmatprep.mubr.f32.mxu0 0.0
        %866 = vmatmul.mubr.f32.gmra.mrb[0].mxu0 %v560
        %v867 = vpop.f32.mrb[0].mxu0
        %v868 = vadd.f32 %v800, %v867
        %v869 = vpop.f32.mrb[0].mxu0
        %870 = vmatprep.mubr.f32.mxu0 0.0
        %871 = vmatmul.mubr.f32.gmra.mrb[0].mxu0 %v563
        %v872 = vpop.f32.mrb[0].mxu0
        %v873 = vadd.f32 %v800, %v872
        %v874 = vpop.f32.mrb[0].mxu0
        %875 = vmatprep.mubr.f32.mxu0 0.0
        %876 = vmatmul.mubr.f32.gmra.mrb[0].mxu0 %v566
        %v877 = vpop.f32.mrb[0].mxu0
        %v878 = vadd.f32 %v800, %v877
        %v879 = vpop.f32.mrb[0].mxu0
        %880 = vmatprep.mubr.f32.mxu0 0.0
        %881 = vmatmul.mubr.f32.gmra.mrb[0].mxu0 %v569
        %v882 = vpop.f32.mrb[0].mxu0
        %v883 = vadd.f32 %v800, %v882
        %v884 = vpop.f32.mrb[0].mxu0
        %885 = vmatprep.mubr.f32.mxu0 0.0
        %886 = vmatmul.mubr.f32.gmra.mrb[0].mxu0 %v572
        %v887 = vpop.f32.mrb[0].mxu0
        %v888 = vadd.f32 %v800, %v887
        %v889 = vpop.f32.mrb[0].mxu0
        %890 = vmatprep.mubr.f32.mxu0 0.0
        %891 = vmatmul.mubr.f32.gmra.mrb[0].mxu0 %v575
        %v892 = vpop.f32.mrb[0].mxu0
        %v893 = vadd.f32 %v800, %v892
        %v894 = vpop.f32.mrb[0].mxu0
        %895 = vmatprep.mubr.f32.mxu0 0.0
        %896 = vmatmul.mubr.f32.gmra.mrb[0].mxu0 %v578
        %v897 = vpop.f32.mrb[0].mxu0
        %v898 = vadd.f32 %v800, %v897
        %v899 = vpop.f32.mrb[0].mxu0
        %900 = vmatprep.mubr.f32.mxu0 0.0
        %901 = vmatmul.mubr.f32.gmra.mrb[0].mxu0 %v581
        %v902 = vpop.f32.mrb[0].mxu0
        %v903 = vadd.f32 %v800, %v902
        %v904 = vpop.f32.mrb[0].mxu0
        %905 = vdwg.mxu0
        %v907 = vsel %vm425, %v650, 0
        %v910 = vsel %vm425, %v655, 0
        %v913 = vsel %vm425, %v660, 0
        %v916 = vsel %vm425, %v665, 0
        %v919 = vsel %vm425, %v670, 0
        %v922 = vsel %vm425, %v675, 0
        %v925 = vsel %vm425, %v680, 0
        %v928 = vsel %vm425, %v685, 0
        %v931 = vsel %vm425, %v759, 0
        %v934 = vsel %vm425, %v764, 0
        %v937 = vsel %vm425, %v769, 0
        %v940 = vsel %vm425, %v774, 0
        %v943 = vsel %vm425, %v779, 0
        %v946 = vsel %vm425, %v784, 0
        %v949 = vsel %vm425, %v789, 0
        %v952 = vsel %vm425, %v794, 0
        %954 = vmatprep.subr.mxu0 0.0
        %955 = vmatpush1.xpose.msra.mxu0 %v931
        %956 = vmatprep.subr.mxu0 0.0
        %957 = vmatpush1.xpose.msra.mxu0 %v934
        %958 = vmatprep.subr.mxu0 0.0
        %959 = vmatpush1.xpose.msra.mxu0 %v937
        %960 = vmatprep.subr.mxu0 0.0
        %961 = vmatpush1.xpose.msra.mxu0 %v940
        %962 = vmatprep.subr.mxu0 0.0
        %963 = vmatpush1.xpose.msra.mxu0 %v943
        %964 = vmatprep.subr.mxu0 0.0
        %965 = vmatpush1.xpose.msra.mxu0 %v946
        %966 = vmatprep.subr.mxu0 0.0
        %967 = vmatpush1.xpose.msra.mxu0 %v949
        %968 = vmatprep.subr.mxu0 0.0
        %969 = vmatpush1.xpose.msra.mxu0 %v952
        %970 = vmatprep.subr.mxu0 0.0
        %971 = vmatpush1.xpose.msra.mxu0 0.0
        %972 = vmatprep.subr.mxu0 0.0
        %973 = vmatpush1.xpose.msra.mxu0 0.0
        %974 = vmatprep.subr.mxu0 0.0
        %975 = vmatpush1.xpose.msra.mxu0 0.0
        %976 = vmatprep.subr.mxu0 0.0
        %977 = vmatpush1.xpose.msra.mxu0 0.0
        %978 = vmatprep.subr.mxu0 0.0
        %979 = vmatpush1.xpose.msra.mxu0 0.0
        %980 = vmatprep.subr.mxu0 0.0
        %981 = vmatpush1.xpose.msra.mxu0 0.0
        %982 = vmatprep.subr.mxu0 0.0
        %983 = vmatpush1.xpose.msra.mxu0 0.0
        %984 = vmatprep.subr.mxu0 0.0
        %985 = vmatpush1.xpose.msra.mxu0 0.0
        %986 = vmatprep.subr.mxu0 0.0
        %987 = vmatpush1.xpose.msra.mxu0 0.0
        %988 = vmatprep.subr.mxu0 0.0
        %989 = vmatpush1.xpose.msra.mxu0 0.0
        %990 = vmatprep.subr.mxu0 0.0
        %991 = vmatpush1.xpose.msra.mxu0 0.0
        %992 = vmatprep.subr.mxu0 0.0
        %993 = vmatpush1.xpose.msra.mxu0 0.0
        %994 = vmatprep.subr.mxu0 0.0
        %995 = vmatpush1.xpose.msra.mxu0 0.0
        %996 = vmatprep.subr.mxu0 0.0
        %997 = vmatpush1.xpose.msra.mxu0 0.0
        %998 = vmatprep.subr.mxu0 0.0
        %999 = vmatpush1.xpose.msra.mxu0 0.0
        %1000 = vmatprep.subr.mxu0 0.0
        %1001 = vmatpush1.xpose.msra.mxu0 0.0
        %1002 = vmatprep.subr.mxu0 0.0
        %1003 = vmatpush1.xpose.msra.mxu0 0.0
        %1004 = vmatprep.subr.mxu0 0.0
        %1005 = vmatpush1.xpose.msra.mxu0 0.0
        %1006 = vmatprep.subr.mxu0 0.0
        %1007 = vmatpush1.xpose.msra.mxu0 0.0
        %1008 = vmatprep.subr.mxu0 0.0
        %1009 = vmatpush1.xpose.msra.mxu0 0.0
        %1010 = vmatprep.subr.mxu0 0.0
        %1011 = vmatpush1.xpose.msra.mxu0 0.0
        %1012 = vmatprep.subr.mxu0 0.0
        %1013 = vmatpush1.xpose.msra.mxu0 0.0
        %1014 = vmatprep.subr.mxu0 0.0
        %1015 = vmatpush1.xpose.msra.mxu0 0.0
        %1016 = vmatprep.subr.mxu0 0.0
        %1017 = vmatpush1.xpose.msra.mxu0 0.0
        %1018 = vmatprep.mubr.f32.mxu0 0.0
        %1019 = vmatmul.mubr.f32.gmra.mrb[0].mxu0 %v907
        %v1020 = vpop.f32.mrb[0].mxu0
        %v1021 = vadd.f32 0.0, %v1020
        %v1022 = vpop.f32.mrb[0].mxu0
        %1023 = vmatprep.mubr.f32.mxu0 0.0
        %1024 = vmatmul.mubr.f32.gmra.mrb[0].mxu0 %v910
        %v1025 = vpop.f32.mrb[0].mxu0
        %v1026 = vadd.f32 0.0, %v1025
        %v1027 = vpop.f32.mrb[0].mxu0
        %1028 = vmatprep.mubr.f32.mxu0 0.0
        %1029 = vmatmul.mubr.f32.gmra.mrb[0].mxu0 %v913
        %v1030 = vpop.f32.mrb[0].mxu0
        %v1031 = vadd.f32 0.0, %v1030
        %v1032 = vpop.f32.mrb[0].mxu0
        %1033 = vmatprep.mubr.f32.mxu0 0.0
        %1034 = vmatmul.mubr.f32.gmra.mrb[0].mxu0 %v916
        %v1035 = vpop.f32.mrb[0].mxu0
        %v1036 = vadd.f32 0.0, %v1035
        %v1037 = vpop.f32.mrb[0].mxu0
        %1038 = vmatprep.mubr.f32.mxu0 0.0
        %1039 = vmatmul.mubr.f32.gmra.mrb[0].mxu0 %v919
        %v1040 = vpop.f32.mrb[0].mxu0
        %v1041 = vadd.f32 0.0, %v1040
        %v1042 = vpop.f32.mrb[0].mxu0
        %1043 = vmatprep.mubr.f32.mxu0 0.0
        %1044 = vmatmul.mubr.f32.gmra.mrb[0].mxu0 %v922
        %v1045 = vpop.f32.mrb[0].mxu0
        %v1046 = vadd.f32 0.0, %v1045
        %v1047 = vpop.f32.mrb[0].mxu0
        %1048 = vmatprep.mubr.f32.mxu0 0.0
        %1049 = vmatmul.mubr.f32.gmra.mrb[0].mxu0 %v925
        %v1050 = vpop.f32.mrb[0].mxu0
        %v1051 = vadd.f32 0.0, %v1050
        %v1052 = vpop.f32.mrb[0].mxu0
        %1053 = vmatprep.mubr.f32.mxu0 0.0
        %1054 = vmatmul.mubr.f32.gmra.mrb[0].mxu0 %v928
        %v1055 = vpop.f32.mrb[0].mxu0
        %v1056 = vadd.f32 0.0, %v1055
        %v1057 = vpop.f32.mrb[0].mxu0
        %1058 = vdwg.mxu0
        %vm1059 = vcmask 523264
        %v1060 = vsel %vm1059, %v1021, -inf
        %1061 = vmax.xlane.f32.xlu0 %v1060
        %v1062 = vpop.xlane.xlu0 %1061
        %v1063 = vsel %vm1059, %v1026, -inf
        %1064 = vmax.xlane.f32.xlu0 %v1063
        %v1065 = vpop.xlane.xlu0 %1064
        %v1066 = vsel %vm1059, %v1031, -inf
        %1067 = vmax.xlane.f32.xlu0 %v1066
        %v1068 = vpop.xlane.xlu0 %1067
        %v1069 = vsel %vm1059, %v1036, -inf
        %1070 = vmax.xlane.f32.xlu0 %v1069
        %v1071 = vpop.xlane.xlu0 %1070
        %v1072 = vsel %vm1059, %v1041, -inf
        %1073 = vmax.xlane.f32.xlu0 %v1072
        %v1074 = vpop.xlane.xlu0 %1073
        %v1075 = vsel %vm1059, %v1046, -inf
        %1076 = vmax.xlane.f32.xlu0 %v1075
        %v1077 = vpop.xlane.xlu0 %1076
        %v1078 = vsel %vm1059, %v1051, -inf
        %1079 = vmax.xlane.f32.xlu0 %v1078
        %v1080 = vpop.xlane.xlu0 %1079
        %v1081 = vsel %vm1059, %v1056, -inf
        %1082 = vmax.xlane.f32.xlu0 %v1081
        %v1083 = vpop.xlane.xlu0 %1082
        %v1084 = vsub.f32 %v1021, %v1062
        %v1085 = vsub.f32 %v1026, %v1065
        %v1086 = vsub.f32 %v1031, %v1068
        %v1087 = vsub.f32 %v1036, %v1071
        %v1088 = vsub.f32 %v1041, %v1074
        %v1089 = vsub.f32 %v1046, %v1077
        %v1090 = vsub.f32 %v1051, %v1080
        %v1091 = vsub.f32 %v1056, %v1083
        %v1092 = vmul.f32 %v1084, 1.442695
        %v1093 = vpow.pop %v1092
        %v1094 = vmul.f32 %v1085, 1.442695
        %v1095 = vpow.pop %v1094
        %v1096 = vmul.f32 %v1086, 1.442695
        %v1097 = vpow.pop %v1096
        %v1098 = vmul.f32 %v1087, 1.442695
        %v1099 = vpow.pop %v1098
        %v1100 = vmul.f32 %v1088, 1.442695
        %v1101 = vpow.pop %v1100
        %v1102 = vmul.f32 %v1089, 1.442695
        %v1103 = vpow.pop %v1102
        %v1104 = vmul.f32 %v1090, 1.442695
        %v1105 = vpow.pop %v1104
        %v1106 = vmul.f32 %v1091, 1.442695
        %v1107 = vpow.pop %v1106
        %v1108 = vsel %vm1059, %v1093, 0.0
        %1109 = vadd.xlane.f32.xlu0 %v1108
        %v1110 = vpop.xlane.xlu0 %1109
        %v1111 = vsel %vm1059, %v1095, 0.0
        %1112 = vadd.xlane.f32.xlu0 %v1111
        %v1113 = vpop.xlane.xlu0 %1112
        %v1114 = vsel %vm1059, %v1097, 0.0
        %1115 = vadd.xlane.f32.xlu0 %v1114
        %v1116 = vpop.xlane.xlu0 %1115
        %v1117 = vsel %vm1059, %v1099, 0.0
        %1118 = vadd.xlane.f32.xlu0 %v1117
        %v1119 = vpop.xlane.xlu0 %1118
        %v1120 = vsel %vm1059, %v1101, 0.0
        %1121 = vadd.xlane.f32.xlu0 %v1120
        %v1122 = vpop.xlane.xlu0 %1121
        %v1123 = vsel %vm1059, %v1103, 0.0
        %1124 = vadd.xlane.f32.xlu0 %v1123
        %v1125 = vpop.xlane.xlu0 %1124
        %v1126 = vsel %vm1059, %v1105, 0.0
        %1127 = vadd.xlane.f32.xlu0 %v1126
        %v1128 = vpop.xlane.xlu0 %1127
        %v1129 = vsel %vm1059, %v1107, 0.0
        %1130 = vadd.xlane.f32.xlu0 %v1129
        %v1131 = vpop.xlane.xlu0 %1130
        %v1133 = vsel %vm1059, %v1093, 0
        %v1136 = vsel %vm1059, %v1095, 0
        %v1139 = vsel %vm1059, %v1097, 0
        %v1142 = vsel %vm1059, %v1099, 0
        %v1145 = vsel %vm1059, %v1101, 0
        %v1148 = vsel %vm1059, %v1103, 0
        %v1151 = vsel %vm1059, %v1105, 0
        %v1154 = vsel %vm1059, %v1107, 0
        %1156 = vmatprep.subr.mxu0 0.0
        %1157 = vmatpush1.msra.mxu0 %v868
        %1158 = vmatprep.subr.mxu0 0.0
        %1159 = vmatpush1.msra.mxu0 %v873
        %1160 = vmatprep.subr.mxu0 0.0
        %1161 = vmatpush1.msra.mxu0 %v878
        %1162 = vmatprep.subr.mxu0 0.0
        %1163 = vmatpush1.msra.mxu0 %v883
        %1164 = vmatprep.subr.mxu0 0.0
        %1165 = vmatpush1.msra.mxu0 %v888
        %1166 = vmatprep.subr.mxu0 0.0
        %1167 = vmatpush1.msra.mxu0 %v893
        %1168 = vmatprep.subr.mxu0 0.0
        %1169 = vmatpush1.msra.mxu0 %v898
        %1170 = vmatprep.subr.mxu0 0.0
        %1171 = vmatpush1.msra.mxu0 %v903
        %1172 = vmatprep.subr.mxu0 0.0
        %1173 = vmatpush1.msra.mxu0 0.0
        %1174 = vmatprep.subr.mxu0 0.0
        %1175 = vmatpush1.msra.mxu0 0.0
        %1176 = vmatprep.subr.mxu0 0.0
        %1177 = vmatpush1.msra.mxu0 0.0
        %1178 = vmatprep.subr.mxu0 0.0
        %1179 = vmatpush1.msra.mxu0 0.0
        %1180 = vmatprep.subr.mxu0 0.0
        %1181 = vmatpush1.msra.mxu0 0.0
        %1182 = vmatprep.subr.mxu0 0.0
        %1183 = vmatpush1.msra.mxu0 0.0
        %1184 = vmatprep.subr.mxu0 0.0
        %1185 = vmatpush1.msra.mxu0 0.0
        %1186 = vmatprep.subr.mxu0 0.0
        %1187 = vmatpush1.msra.mxu0 0.0
        %1188 = vmatprep.subr.mxu0 0.0
        %1189 = vmatpush1.msra.mxu0 0.0
        %1190 = vmatprep.subr.mxu0 0.0
        %1191 = vmatpush1.msra.mxu0 0.0
        %1192 = vmatprep.subr.mxu0 0.0
        %1193 = vmatpush1.msra.mxu0 0.0
        %1194 = vmatprep.subr.mxu0 0.0
        %1195 = vmatpush1.msra.mxu0 0.0
        %1196 = vmatprep.subr.mxu0 0.0
        %1197 = vmatpush1.msra.mxu0 0.0
        %1198 = vmatprep.subr.mxu0 0.0
        %1199 = vmatpush1.msra.mxu0 0.0
        %1200 = vmatprep.subr.mxu0 0.0
        %1201 = vmatpush1.msra.mxu0 0.0
        %1202 = vmatprep.subr.mxu0 0.0
        %1203 = vmatpush1.msra.mxu0 0.0
        %1204 = vmatprep.subr.mxu0 0.0
        %1205 = vmatpush1.msra.mxu0 0.0
        %1206 = vmatprep.subr.mxu0 0.0
        %1207 = vmatpush1.msra.mxu0 0.0
        %1208 = vmatprep.subr.mxu0 0.0
        %1209 = vmatpush1.msra.mxu0 0.0
        %1210 = vmatprep.subr.mxu0 0.0
        %1211 = vmatpush1.msra.mxu0 0.0
        %1212 = vmatprep.subr.mxu0 0.0
        %1213 = vmatpush1.msra.mxu0 0.0
        %1214 = vmatprep.subr.mxu0 0.0
        %1215 = vmatpush1.msra.mxu0 0.0
        %1216 = vmatprep.subr.mxu0 0.0
        %1217 = vmatpush1.msra.mxu0 0.0
        %1218 = vmatprep.subr.mxu0 0.0
        %1219 = vmatpush1.msra.mxu0 0.0
        %1220 = vmatprep.mubr.f32.mxu0 0.0
        %1221 = vmatmul.mubr.f32.gmra.mrb[0].mxu0 %v1133
        %v1222 = vpop.f32.mrb[0].mxu0
        %v1223 = vadd.f32 0.0, %v1222
        %v1224 = vpop.f32.mrb[0].mxu0
        %1225 = vmatprep.mubr.f32.mxu0 0.0
        %1226 = vmatmul.mubr.f32.gmra.mrb[0].mxu0 %v1136
        %v1227 = vpop.f32.mrb[0].mxu0
        %v1228 = vadd.f32 0.0, %v1227
        %v1229 = vpop.f32.mrb[0].mxu0
        %1230 = vmatprep.mubr.f32.mxu0 0.0
        %1231 = vmatmul.mubr.f32.gmra.mrb[0].mxu0 %v1139
        %v1232 = vpop.f32.mrb[0].mxu0
        %v1233 = vadd.f32 0.0, %v1232
        %v1234 = vpop.f32.mrb[0].mxu0
        %1235 = vmatprep.mubr.f32.mxu0 0.0
        %1236 = vmatmul.mubr.f32.gmra.mrb[0].mxu0 %v1142
        %v1237 = vpop.f32.mrb[0].mxu0
        %v1238 = vadd.f32 0.0, %v1237
        %v1239 = vpop.f32.mrb[0].mxu0
        %1240 = vmatprep.mubr.f32.mxu0 0.0
        %1241 = vmatmul.mubr.f32.gmra.mrb[0].mxu0 %v1145
        %v1242 = vpop.f32.mrb[0].mxu0
        %v1243 = vadd.f32 0.0, %v1242
        %v1244 = vpop.f32.mrb[0].mxu0
        %1245 = vmatprep.mubr.f32.mxu0 0.0
        %1246 = vmatmul.mubr.f32.gmra.mrb[0].mxu0 %v1148
        %v1247 = vpop.f32.mrb[0].mxu0
        %v1248 = vadd.f32 0.0, %v1247
        %v1249 = vpop.f32.mrb[0].mxu0
        %1250 = vmatprep.mubr.f32.mxu0 0.0
        %1251 = vmatmul.mubr.f32.gmra.mrb[0].mxu0 %v1151
        %v1252 = vpop.f32.mrb[0].mxu0
        %v1253 = vadd.f32 0.0, %v1252
        %v1254 = vpop.f32.mrb[0].mxu0
        %1255 = vmatprep.mubr.f32.mxu0 0.0
        %1256 = vmatmul.mubr.f32.gmra.mrb[0].mxu0 %v1154
        %v1257 = vpop.f32.mrb[0].mxu0
        %v1258 = vadd.f32 0.0, %v1257
        %v1259 = vpop.f32.mrb[0].mxu0
        %1260 = vdwg.mxu0
        %v1261 = vrcp.pop %v1110
        %v1262 = vrcp.pop %v1113
        %v1263 = vrcp.pop %v1116
        %v1264 = vrcp.pop %v1119
        %v1265 = vrcp.pop %v1122
        %v1266 = vrcp.pop %v1125
        %v1267 = vrcp.pop %v1128
        %v1268 = vrcp.pop %v1131
        %v1269 = vmul.f32 %v1223, %v1261
        %v1270 = vmul.f32 %v1228, %v1262
        %v1271 = vmul.f32 %v1233, %v1263
        %v1272 = vmul.f32 %v1238, %v1264
        %v1273 = vmul.f32 %v1243, %v1265
        %v1274 = vmul.f32 %v1248, %v1266
        %v1275 = vmul.f32 %v1253, %v1267
        %v1276 = vmul.f32 %v1258, %v1268
        %v1278 = vsel %vm425, %v1269, 0
        %v1281 = vsel %vm425, %v1270, 0
        %v1284 = vsel %vm425, %v1271, 0
        %v1287 = vsel %vm425, %v1272, 0
        %v1290 = vsel %vm425, %v1273, 0
        %v1293 = vsel %vm425, %v1274, 0
        %v1296 = vsel %vm425, %v1275, 0
        %v1299 = vsel %vm425, %v1276, 0
        %1301 = vmatprep.subr.mxu0 0.0
        %1302 = vmatpush1.msra.mxu0 %v171
        %1303 = vmatprep.subr.mxu0 0.0
        %1304 = vmatpush1.msra.mxu0 %v172
        %1305 = vmatprep.subr.mxu0 0.0
        %1306 = vmatpush1.msra.mxu0 %v173
        %1307 = vmatprep.subr.mxu0 0.0
        %1308 = vmatpush1.msra.mxu0 %v174
        %1309 = vmatprep.subr.mxu0 0.0
        %1310 = vmatpush1.msra.mxu0 0.0
        %1311 = vmatprep.subr.mxu0 0.0
        %1312 = vmatpush1.msra.mxu0 0.0
        %1313 = vmatprep.subr.mxu0 0.0
        %1314 = vmatpush1.msra.mxu0 0.0
        %1315 = vmatprep.subr.mxu0 0.0
        %1316 = vmatpush1.msra.mxu0 0.0
        %1317 = vmatprep.subr.mxu0 0.0
        %1318 = vmatpush1.msra.mxu0 0.0
        %1319 = vmatprep.subr.mxu0 0.0
        %1320 = vmatpush1.msra.mxu0 0.0
        %1321 = vmatprep.subr.mxu0 0.0
        %1322 = vmatpush1.msra.mxu0 0.0
        %1323 = vmatprep.subr.mxu0 0.0
        %1324 = vmatpush1.msra.mxu0 0.0
        %1325 = vmatprep.subr.mxu0 0.0
        %1326 = vmatpush1.msra.mxu0 0.0
        %1327 = vmatprep.subr.mxu0 0.0
        %1328 = vmatpush1.msra.mxu0 0.0
        %1329 = vmatprep.subr.mxu0 0.0
        %1330 = vmatpush1.msra.mxu0 0.0
        %1331 = vmatprep.subr.mxu0 0.0
        %1332 = vmatpush1.msra.mxu0 0.0
        %1333 = vmatprep.subr.mxu0 0.0
        %1334 = vmatpush1.msra.mxu0 0.0
        %1335 = vmatprep.subr.mxu0 0.0
        %1336 = vmatpush1.msra.mxu0 0.0
        %1337 = vmatprep.subr.mxu0 0.0
        %1338 = vmatpush1.msra.mxu0 0.0
        %1339 = vmatprep.subr.mxu0 0.0
        %1340 = vmatpush1.msra.mxu0 0.0
        %1341 = vmatprep.subr.mxu0 0.0
        %1342 = vmatpush1.msra.mxu0 0.0
        %1343 = vmatprep.subr.mxu0 0.0
        %1344 = vmatpush1.msra.mxu0 0.0
        %1345 = vmatprep.subr.mxu0 0.0
        %1346 = vmatpush1.msra.mxu0 0.0
        %1347 = vmatprep.subr.mxu0 0.0
        %1348 = vmatpush1.msra.mxu0 0.0
        %1349 = vmatprep.subr.mxu0 0.0
        %1350 = vmatpush1.msra.mxu0 0.0
        %1351 = vmatprep.subr.mxu0 0.0
        %1352 = vmatpush1.msra.mxu0 0.0
        %1353 = vmatprep.subr.mxu0 0.0
        %1354 = vmatpush1.msra.mxu0 0.0
        %1355 = vmatprep.subr.mxu0 0.0
        %1356 = vmatpush1.msra.mxu0 0.0
        %1357 = vmatprep.subr.mxu0 0.0
        %1358 = vmatpush1.msra.mxu0 0.0
        %1359 = vmatprep.subr.mxu0 0.0
        %1360 = vmatpush1.msra.mxu0 0.0
        %1361 = vmatprep.subr.mxu0 0.0
        %1362 = vmatpush1.msra.mxu0 0.0
        %1363 = vmatprep.subr.mxu0 0.0
        %1364 = vmatpush1.msra.mxu0 0.0
        %1365 = vmatprep.mubr.f32.mxu0 0.0
        %1366 = vmatmul.mubr.f32.gmra.mrb[0].mxu0 %v1278
        %v1367 = vpop.f32.mrb[0].mxu0
        %v1368 = vadd.f32 0.0, %v1367
        %v1369 = vpop.f32.mrb[0].mxu0
        %1370 = vmatprep.mubr.f32.mxu0 0.0
        %1371 = vmatmul.mubr.f32.gmra.mrb[0].mxu0 %v1281
        %v1372 = vpop.f32.mrb[0].mxu0
        %v1373 = vadd.f32 0.0, %v1372
        %v1374 = vpop.f32.mrb[0].mxu0
        %1375 = vmatprep.mubr.f32.mxu0 0.0
        %1376 = vmatmul.mubr.f32.gmra.mrb[0].mxu0 %v1284
        %v1377 = vpop.f32.mrb[0].mxu0
        %v1378 = vadd.f32 0.0, %v1377
        %v1379 = vpop.f32.mrb[0].mxu0
        %1380 = vmatprep.mubr.f32.mxu0 0.0
        %1381 = vmatmul.mubr.f32.gmra.mrb[0].mxu0 %v1287
        %v1382 = vpop.f32.mrb[0].mxu0
        %v1383 = vadd.f32 0.0, %v1382
        %v1384 = vpop.f32.mrb[0].mxu0
        %1385 = vmatprep.mubr.f32.mxu0 0.0
        %1386 = vmatmul.mubr.f32.gmra.mrb[0].mxu0 %v1290
        %v1387 = vpop.f32.mrb[0].mxu0
        %v1388 = vadd.f32 0.0, %v1387
        %v1389 = vpop.f32.mrb[0].mxu0
        %1390 = vmatprep.mubr.f32.mxu0 0.0
        %1391 = vmatmul.mubr.f32.gmra.mrb[0].mxu0 %v1293
        %v1392 = vpop.f32.mrb[0].mxu0
        %v1393 = vadd.f32 0.0, %v1392
        %v1394 = vpop.f32.mrb[0].mxu0
        %1395 = vmatprep.mubr.f32.mxu0 0.0
        %1396 = vmatmul.mubr.f32.gmra.mrb[0].mxu0 %v1296
        %v1397 = vpop.f32.mrb[0].mxu0
        %v1398 = vadd.f32 0.0, %v1397
        %v1399 = vpop.f32.mrb[0].mxu0
        %1400 = vmatprep.mubr.f32.mxu0 0.0
        %1401 = vmatmul.mubr.f32.gmra.mrb[0].mxu0 %v1299
        %v1402 = vpop.f32.mrb[0].mxu0
        %v1403 = vadd.f32 0.0, %v1402
        %v1404 = vpop.f32.mrb[0].mxu0
        %1405 = vdwg.mxu0
        %v1406 = vadd.f32 %v417, %v1368
        %v1407 = vadd.f32 %v418, %v1373
        %v1408 = vadd.f32 %v419, %v1378
        %v1409 = vadd.f32 %v420, %v1383
        %v1410 = vadd.f32 %v421, %v1388
        %v1411 = vadd.f32 %v422, %v1393
        %v1412 = vadd.f32 %v423, %v1398
        %v1413 = vadd.f32 %v424, %v1403
        %v1414 = vlaneseq
        %v1415 = vshrl.u32 %v1414, 7
        %v1416 = vsub.s32 0, %v1415
        %v1417 = vrot.slane %v205, %v1416
        %v1418 = vadd.f32 %v1406, %v1417
        %v1419 = vadd.f32 %v1407, %v1417
        %v1420 = vadd.f32 %v1408, %v1417
        %v1421 = vadd.f32 %v1409, %v1417
        %v1422 = vadd.f32 %v1410, %v1417
        %v1423 = vadd.f32 %v1411, %v1417
        %v1424 = vadd.f32 %v1412, %v1417
        %v1425 = vadd.f32 %v1413, %v1417
        %v1426 = vsel %vm425, %v1418, 0.0
        %1427 = vadd.xlane.f32.xlu0 %v1426
        %v1428 = vpop.xlane.xlu0 %1427
        %v1429 = vsel %vm425, %v1419, 0.0
        %1430 = vadd.xlane.f32.xlu0 %v1429
        %v1431 = vpop.xlane.xlu0 %1430
        %v1432 = vsel %vm425, %v1420, 0.0
        %1433 = vadd.xlane.f32.xlu0 %v1432
        %v1434 = vpop.xlane.xlu0 %1433
        %v1435 = vsel %vm425, %v1421, 0.0
        %1436 = vadd.xlane.f32.xlu0 %v1435
        %v1437 = vpop.xlane.xlu0 %1436
        %v1438 = vsel %vm425, %v1422, 0.0
        %1439 = vadd.xlane.f32.xlu0 %v1438
        %v1440 = vpop.xlane.xlu0 %1439
        %v1441 = vsel %vm425, %v1423, 0.0
        %1442 = vadd.xlane.f32.xlu0 %v1441
        %v1443 = vpop.xlane.xlu0 %1442
        %v1444 = vsel %vm425, %v1424, 0.0
        %1445 = vadd.xlane.f32.xlu0 %v1444
        %v1446 = vpop.xlane.xlu0 %1445
        %v1447 = vsel %vm425, %v1425, 0.0
        %1448 = vadd.xlane.f32.xlu0 %v1447
        %v1449 = vpop.xlane.xlu0 %1448
        %v1450 = vmul.f32 %v1428, %v450
        %v1451 = vmul.f32 %v1431, %v450
        %v1452 = vmul.f32 %v1434, %v450
        %v1453 = vmul.f32 %v1437, %v450
        %v1454 = vmul.f32 %v1440, %v450
        %v1455 = vmul.f32 %v1443, %v450
        %v1456 = vmul.f32 %v1446, %v450
        %v1457 = vmul.f32 %v1449, %v450
        %v1458 = vsub.f32 %v1418, %v1450
        %v1459 = vsub.f32 %v1419, %v1451
        %v1460 = vsub.f32 %v1420, %v1452
        %v1461 = vsub.f32 %v1421, %v1453
        %v1462 = vsub.f32 %v1422, %v1454
        %v1463 = vsub.f32 %v1423, %v1455
        %v1464 = vsub.f32 %v1424, %v1456
        %v1465 = vsub.f32 %v1425, %v1457
        %v1466 = vmul.f32 %v1458, %v1458
        %v1467 = vmul.f32 %v1459, %v1459
        %v1468 = vmul.f32 %v1460, %v1460
        %v1469 = vmul.f32 %v1461, %v1461
        %v1470 = vmul.f32 %v1462, %v1462
        %v1471 = vmul.f32 %v1463, %v1463
        %v1472 = vmul.f32 %v1464, %v1464
        %v1473 = vmul.f32 %v1465, %v1465
        %v1474 = vsel %vm425, %v1466, 0.0
        %1475 = vadd.xlane.f32.xlu0 %v1474
        %v1476 = vpop.xlane.xlu0 %1475
        %v1477 = vsel %vm425, %v1467, 0.0
        %1478 = vadd.xlane.f32.xlu0 %v1477
        %v1479 = vpop.xlane.xlu0 %1478
        %v1480 = vsel %vm425, %v1468, 0.0
        %1481 = vadd.xlane.f32.xlu0 %v1480
        %v1482 = vpop.xlane.xlu0 %1481
        %v1483 = vsel %vm425, %v1469, 0.0
        %1484 = vadd.xlane.f32.xlu0 %v1483
        %v1485 = vpop.xlane.xlu0 %1484
        %v1486 = vsel %vm425, %v1470, 0.0
        %1487 = vadd.xlane.f32.xlu0 %v1486
        %v1488 = vpop.xlane.xlu0 %1487
        %v1489 = vsel %vm425, %v1471, 0.0
        %1490 = vadd.xlane.f32.xlu0 %v1489
        %v1491 = vpop.xlane.xlu0 %1490
        %v1492 = vsel %vm425, %v1472, 0.0
        %1493 = vadd.xlane.f32.xlu0 %v1492
        %v1494 = vpop.xlane.xlu0 %1493
        %v1495 = vsel %vm425, %v1473, 0.0
        %1496 = vadd.xlane.f32.xlu0 %v1495
        %v1497 = vpop.xlane.xlu0 %1496
        %v1498 = vmul.f32 %v1476, %v450
        %v1499 = vmul.f32 %v1479, %v450
        %v1500 = vmul.f32 %v1482, %v450
        %v1501 = vmul.f32 %v1485, %v450
        %v1502 = vmul.f32 %v1488, %v450
        %v1503 = vmul.f32 %v1491, %v450
        %v1504 = vmul.f32 %v1494, %v450
        %v1505 = vmul.f32 %v1497, %v450
        %v1506 = vadd.f32 %v1498, 1e-05
        %v1507 = vadd.f32 %v1499, 1e-05
        %v1508 = vadd.f32 %v1500, 1e-05
        %v1509 = vadd.f32 %v1501, 1e-05
        %v1510 = vadd.f32 %v1502, 1e-05
        %v1511 = vadd.f32 %v1503, 1e-05
        %v1512 = vadd.f32 %v1504, 1e-05
        %v1513 = vadd.f32 %v1505, 1e-05
        %v1514 = vrsqrt.pop %v1506
        %v1515 = vrsqrt.pop %v1507
        %v1516 = vrsqrt.pop %v1508
        %v1517 = vrsqrt.pop %v1509
        %v1518 = vrsqrt.pop %v1510
        %v1519 = vrsqrt.pop %v1511
        %v1520 = vrsqrt.pop %v1512
        %v1521 = vrsqrt.pop %v1513
        %v1522 = vmul.f32 %v1458, %v1514
        %v1523 = vmul.f32 %v1459, %v1515
        %v1524 = vmul.f32 %v1460, %v1516
        %v1525 = vmul.f32 %v1461, %v1517
        %v1526 = vmul.f32 %v1462, %v1518
        %v1527 = vmul.f32 %v1463, %v1519
        %v1528 = vmul.f32 %v1464, %v1520
        %v1529 = vmul.f32 %v1465, %v1521
        %v1530 = vlaneseq
        %v1531 = vshrl.u32 %v1530, 7
        %v1532 = vsub.s32 0, %v1531
        %v1533 = vrot.slane %v206, %v1532
        %v1534 = vmul.f32 %v1522, %v1533
        %v1535 = vmul.f32 %v1523, %v1533
        %v1536 = vmul.f32 %v1524, %v1533
        %v1537 = vmul.f32 %v1525, %v1533
        %v1538 = vmul.f32 %v1526, %v1533
        %v1539 = vmul.f32 %v1527, %v1533
        %v1540 = vmul.f32 %v1528, %v1533
        %v1541 = vmul.f32 %v1529, %v1533
        %v1542 = vlaneseq
        %v1543 = vshrl.u32 %v1542, 7
        %v1544 = vsub.s32 0, %v1543
        %v1545 = vrot.slane %v207, %v1544
        %v1546 = vadd.f32 %v1534, %v1545
        %v1547 = vadd.f32 %v1535, %v1545
        %v1548 = vadd.f32 %v1536, %v1545
        %v1549 = vadd.f32 %v1537, %v1545
        %v1550 = vadd.f32 %v1538, %v1545
        %v1551 = vadd.f32 %v1539, %v1545
        %v1552 = vadd.f32 %v1540, %v1545
        %v1553 = vadd.f32 %v1541, %v1545
        %v1554 = vlaneseq
        %v1555 = vshrl.u32 %v1554, 7
        %v1556 = vsub.s32 0, %v1555
        %v1557 = vrot.slane %v208, %v1556
        %v1559 = vsel %vm425, %v1546, 0
        %v1562 = vsel %vm425, %v1547, 0
        %v1565 = vsel %vm425, %v1548, 0
        %v1568 = vsel %vm425, %v1549, 0
        %v1571 = vsel %vm425, %v1550, 0
        %v1574 = vsel %vm425, %v1551, 0
        %v1577 = vsel %vm425, %v1552, 0
        %v1580 = vsel %vm425, %v1553, 0
        %1582 = vmatprep.subr.mxu0 0.0
        %1583 = vmatpush1.msra.mxu0 %v175
        %1584 = vmatprep.subr.mxu0 0.0
        %1585 = vmatpush1.msra.mxu0 %v176
        %1586 = vmatprep.subr.mxu0 0.0
        %1587 = vmatpush1.msra.mxu0 %v177
        %1588 = vmatprep.subr.mxu0 0.0
        %1589 = vmatpush1.msra.mxu0 %v178
        %1590 = vmatprep.subr.mxu0 0.0
        %1591 = vmatpush1.msra.mxu0 0.0
        %1592 = vmatprep.subr.mxu0 0.0
        %1593 = vmatpush1.msra.mxu0 0.0
        %1594 = vmatprep.subr.mxu0 0.0
        %1595 = vmatpush1.msra.mxu0 0.0
        %1596 = vmatprep.subr.mxu0 0.0
        %1597 = vmatpush1.msra.mxu0 0.0
        %1598 = vmatprep.subr.mxu0 0.0
        %1599 = vmatpush1.msra.mxu0 0.0
        %1600 = vmatprep.subr.mxu0 0.0
        %1601 = vmatpush1.msra.mxu0 0.0
        %1602 = vmatprep.subr.mxu0 0.0
        %1603 = vmatpush1.msra.mxu0 0.0
        %1604 = vmatprep.subr.mxu0 0.0
        %1605 = vmatpush1.msra.mxu0 0.0
        %1606 = vmatprep.subr.mxu0 0.0
        %1607 = vmatpush1.msra.mxu0 0.0
        %1608 = vmatprep.subr.mxu0 0.0
        %1609 = vmatpush1.msra.mxu0 0.0
        %1610 = vmatprep.subr.mxu0 0.0
        %1611 = vmatpush1.msra.mxu0 0.0
        %1612 = vmatprep.subr.mxu0 0.0
        %1613 = vmatpush1.msra.mxu0 0.0
        %1614 = vmatprep.subr.mxu0 0.0
        %1615 = vmatpush1.msra.mxu0 0.0
        %1616 = vmatprep.subr.mxu0 0.0
        %1617 = vmatpush1.msra.mxu0 0.0
        %1618 = vmatprep.subr.mxu0 0.0
        %1619 = vmatpush1.msra.mxu0 0.0
        %1620 = vmatprep.subr.mxu0 0.0
        %1621 = vmatpush1.msra.mxu0 0.0
        %1622 = vmatprep.subr.mxu0 0.0
        %1623 = vmatpush1.msra.mxu0 0.0
        %1624 = vmatprep.subr.mxu0 0.0
        %1625 = vmatpush1.msra.mxu0 0.0
        %1626 = vmatprep.subr.mxu0 0.0
        %1627 = vmatpush1.msra.mxu0 0.0
        %1628 = vmatprep.subr.mxu0 0.0
        %1629 = vmatpush1.msra.mxu0 0.0
        %1630 = vmatprep.subr.mxu0 0.0
        %1631 = vmatpush1.msra.mxu0 0.0
        %1632 = vmatprep.subr.mxu0 0.0
        %1633 = vmatpush1.msra.mxu0 0.0
        %1634 = vmatprep.subr.mxu0 0.0
        %1635 = vmatpush1.msra.mxu0 0.0
        %1636 = vmatprep.subr.mxu0 0.0
        %1637 = vmatpush1.msra.mxu0 0.0
        %1638 = vmatprep.subr.mxu0 0.0
        %1639 = vmatpush1.msra.mxu0 0.0
        %1640 = vmatprep.subr.mxu0 0.0
        %1641 = vmatpush1.msra.mxu0 0.0
        %1642 = vmatprep.subr.mxu0 0.0
        %1643 = vmatpush1.msra.mxu0 0.0
        %1644 = vmatprep.subr.mxu0 0.0
        %1645 = vmatpush1.msra.mxu0 0.0
        %1646 = vmatprep.mubr.f32.mxu0 0.0
        %1647 = vmatmul.mubr.f32.gmra.mrb[0].mxu0 %v1559
        %v1648 = vpop.f32.mrb[0].mxu0
        %v1649 = vadd.f32 %v1557, %v1648
        %v1650 = vpop.f32.mrb[0].mxu0
        %1651 = vmatprep.mubr.f32.mxu0 0.0
        %1652 = vmatmul.mubr.f32.gmra.mrb[0].mxu0 %v1562
        %v1653 = vpop.f32.mrb[0].mxu0
        %v1654 = vadd.f32 %v1557, %v1653
        %v1655 = vpop.f32.mrb[0].mxu0
        %1656 = vmatprep.mubr.f32.mxu0 0.0
        %1657 = vmatmul.mubr.f32.gmra.mrb[0].mxu0 %v1565
        %v1658 = vpop.f32.mrb[0].mxu0
        %v1659 = vadd.f32 %v1557, %v1658
        %v1660 = vpop.f32.mrb[0].mxu0
        %1661 = vmatprep.mubr.f32.mxu0 0.0
        %1662 = vmatmul.mubr.f32.gmra.mrb[0].mxu0 %v1568
        %v1663 = vpop.f32.mrb[0].mxu0
        %v1664 = vadd.f32 %v1557, %v1663
        %v1665 = vpop.f32.mrb[0].mxu0
        %1666 = vmatprep.mubr.f32.mxu0 0.0
        %1667 = vmatmul.mubr.f32.gmra.mrb[0].mxu0 %v1571
        %v1668 = vpop.f32.mrb[0].mxu0
        %v1669 = vadd.f32 %v1557, %v1668
        %v1670 = vpop.f32.mrb[0].mxu0
        %1671 = vmatprep.mubr.f32.mxu0 0.0
        %1672 = vmatmul.mubr.f32.gmra.mrb[0].mxu0 %v1574
        %v1673 = vpop.f32.mrb[0].mxu0
        %v1674 = vadd.f32 %v1557, %v1673
        %v1675 = vpop.f32.mrb[0].mxu0
        %1676 = vmatprep.mubr.f32.mxu0 0.0
        %1677 = vmatmul.mubr.f32.gmra.mrb[0].mxu0 %v1577
        %v1678 = vpop.f32.mrb[0].mxu0
        %v1679 = vadd.f32 %v1557, %v1678
        %v1680 = vpop.f32.mrb[0].mxu0
        %1681 = vmatprep.mubr.f32.mxu0 0.0
        %1682 = vmatmul.mubr.f32.gmra.mrb[0].mxu0 %v1580
        %v1683 = vpop.f32.mrb[0].mxu0
        %v1684 = vadd.f32 %v1557, %v1683
        %v1685 = vpop.f32.mrb[0].mxu0
        %1686 = vdwg.mxu0
        %v1687 = vmul.f32 %v1649, %v1649
        %v1688 = vmul.f32 %v1654, %v1654
        %v1689 = vmul.f32 %v1659, %v1659
        %v1690 = vmul.f32 %v1664, %v1664
        %v1691 = vmul.f32 %v1669, %v1669
        %v1692 = vmul.f32 %v1674, %v1674
        %v1693 = vmul.f32 %v1679, %v1679
        %v1694 = vmul.f32 %v1684, %v1684
        %v1695 = vmul.f32 %v1649, %v1687
        %v1696 = vmul.f32 %v1654, %v1688
        %v1697 = vmul.f32 %v1659, %v1689
        %v1698 = vmul.f32 %v1664, %v1690
        %v1699 = vmul.f32 %v1669, %v1691
        %v1700 = vmul.f32 %v1674, %v1692
        %v1701 = vmul.f32 %v1679, %v1693
        %v1702 = vmul.f32 %v1684, %v1694
        %v1703 = vmul.f32 %v1695, 0.044715
        %v1704 = vmul.f32 %v1696, 0.044715
        %v1705 = vmul.f32 %v1697, 0.044715
        %v1706 = vmul.f32 %v1698, 0.044715
        %v1707 = vmul.f32 %v1699, 0.044715
        %v1708 = vmul.f32 %v1700, 0.044715
        %v1709 = vmul.f32 %v1701, 0.044715
        %v1710 = vmul.f32 %v1702, 0.044715
        %v1711 = vadd.f32 %v1649, %v1703
        %v1712 = vadd.f32 %v1654, %v1704
        %v1713 = vadd.f32 %v1659, %v1705
        %v1714 = vadd.f32 %v1664, %v1706
        %v1715 = vadd.f32 %v1669, %v1707
        %v1716 = vadd.f32 %v1674, %v1708
        %v1717 = vadd.f32 %v1679, %v1709
        %v1718 = vadd.f32 %v1684, %v1710
        %v1719 = vmul.f32 %v1711, 0.7978846
        %v1720 = vmul.f32 %v1712, 0.7978846
        %v1721 = vmul.f32 %v1713, 0.7978846
        %v1722 = vmul.f32 %v1714, 0.7978846
        %v1723 = vmul.f32 %v1715, 0.7978846
        %v1724 = vmul.f32 %v1716, 0.7978846
        %v1725 = vmul.f32 %v1717, 0.7978846
        %v1726 = vmul.f32 %v1718, 0.7978846
        %v1727 = vtanh.pop %v1719
        %v1728 = vtanh.pop %v1720
        %v1729 = vtanh.pop %v1721
        %v1730 = vtanh.pop %v1722
        %v1731 = vtanh.pop %v1723
        %v1732 = vtanh.pop %v1724
        %v1733 = vtanh.pop %v1725
        %v1734 = vtanh.pop %v1726
        %v1735 = vadd.f32 %v1727, 1.0
        %v1736 = vadd.f32 %v1728, 1.0
        %v1737 = vadd.f32 %v1729, 1.0
        %v1738 = vadd.f32 %v1730, 1.0
        %v1739 = vadd.f32 %v1731, 1.0
        %v1740 = vadd.f32 %v1732, 1.0
        %v1741 = vadd.f32 %v1733, 1.0
        %v1742 = vadd.f32 %v1734, 1.0
        %v1743 = vmul.f32 %v1735, 0.5
        %v1744 = vmul.f32 %v1736, 0.5
        %v1745 = vmul.f32 %v1737, 0.5
        %v1746 = vmul.f32 %v1738, 0.5
        %v1747 = vmul.f32 %v1739, 0.5
        %v1748 = vmul.f32 %v1740, 0.5
        %v1749 = vmul.f32 %v1741, 0.5
        %v1750 = vmul.f32 %v1742, 0.5
        %v1751 = vmul.f32 %v1649, %v1743
        %v1752 = vmul.f32 %v1654, %v1744
        %v1753 = vmul.f32 %v1659, %v1745
        %v1754 = vmul.f32 %v1664, %v1746
        %v1755 = vmul.f32 %v1669, %v1747
        %v1756 = vmul.f32 %v1674, %v1748
        %v1757 = vmul.f32 %v1679, %v1749
        %v1758 = vmul.f32 %v1684, %v1750
        %1759 = vmatprep.subr.mxu0 0.0
        %1760 = vmatpush1.msra.mxu0 %v179
        %1761 = vmatprep.subr.mxu0 0.0
        %1762 = vmatpush1.msra.mxu0 %v180
        %1763 = vmatprep.subr.mxu0 0.0
        %1764 = vmatpush1.msra.mxu0 %v181
        %1765 = vmatprep.subr.mxu0 0.0
        %1766 = vmatpush1.msra.mxu0 %v182
        %1767 = vmatprep.subr.mxu0 0.0
        %1768 = vmatpush1.msra.mxu0 %v183
        %1769 = vmatprep.subr.mxu0 0.0
        %1770 = vmatpush1.msra.mxu0 %v184
        %1771 = vmatprep.subr.mxu0 0.0
        %1772 = vmatpush1.msra.mxu0 %v185
        %1773 = vmatprep.subr.mxu0 0.0
        %1774 = vmatpush1.msra.mxu0 %v186
        %1775 = vmatprep.subr.mxu0 0.0
        %1776 = vmatpush1.msra.mxu0 %v187
        %1777 = vmatprep.subr.mxu0 0.0
        %1778 = vmatpush1.msra.mxu0 %v188
        %1779 = vmatprep.subr.mxu0 0.0
        %1780 = vmatpush1.msra.mxu0 %v189
        %1781 = vmatprep.subr.mxu0 0.0
        %1782 = vmatpush1.msra.mxu0 %v190
        %1783 = vmatprep.subr.mxu0 0.0
        %1784 = vmatpush1.msra.mxu0 %v191
        %1785 = vmatprep.subr.mxu0 0.0
        %1786 = vmatpush1.msra.mxu0 %v192
        %1787 = vmatprep.subr.mxu0 0.0
        %1788 = vmatpush1.msra.mxu0 %v193
        %1789 = vmatprep.subr.mxu0 0.0
        %1790 = vmatpush1.msra.mxu0 %v194
        %1791 = vmatprep.subr.mxu0 0.0
        %1792 = vmatpush1.msra.mxu0 0.0
        %1793 = vmatprep.subr.mxu0 0.0
        %1794 = vmatpush1.msra.mxu0 0.0
        %1795 = vmatprep.subr.mxu0 0.0
        %1796 = vmatpush1.msra.mxu0 0.0
        %1797 = vmatprep.subr.mxu0 0.0
        %1798 = vmatpush1.msra.mxu0 0.0
        %1799 = vmatprep.subr.mxu0 0.0
        %1800 = vmatpush1.msra.mxu0 0.0
        %1801 = vmatprep.subr.mxu0 0.0
        %1802 = vmatpush1.msra.mxu0 0.0
        %1803 = vmatprep.subr.mxu0 0.0
        %1804 = vmatpush1.msra.mxu0 0.0
        %1805 = vmatprep.subr.mxu0 0.0
        %1806 = vmatpush1.msra.mxu0 0.0
        %1807 = vmatprep.subr.mxu0 0.0
        %1808 = vmatpush1.msra.mxu0 0.0
        %1809 = vmatprep.subr.mxu0 0.0
        %1810 = vmatpush1.msra.mxu0 0.0
        %1811 = vmatprep.subr.mxu0 0.0
        %1812 = vmatpush1.msra.mxu0 0.0
        %1813 = vmatprep.subr.mxu0 0.0
        %1814 = vmatpush1.msra.mxu0 0.0
        %1815 = vmatprep.subr.mxu0 0.0
        %1816 = vmatpush1.msra.mxu0 0.0
        %1817 = vmatprep.subr.mxu0 0.0
        %1818 = vmatpush1.msra.mxu0 0.0
        %1819 = vmatprep.subr.mxu0 0.0
        %1820 = vmatpush1.msra.mxu0 0.0
        %1821 = vmatprep.subr.mxu0 0.0
        %1822 = vmatpush1.msra.mxu0 0.0
        %1823 = vmatprep.mubr.f32.mxu0 0.0
        %1824 = vmatmul.mubr.f32.gmra.mrb[0].mxu0 %v1751
        %v1825 = vpop.f32.mrb[0].mxu0
        %v1826 = vadd.f32 0.0, %v1825
        %v1827 = vpop.f32.mrb[0].mxu0
        %1828 = vmatprep.mubr.f32.mxu0 0.0
        %1829 = vmatmul.mubr.f32.gmra.mrb[0].mxu0 %v1752
        %v1830 = vpop.f32.mrb[0].mxu0
        %v1831 = vadd.f32 0.0, %v1830
        %v1832 = vpop.f32.mrb[0].mxu0
        %1833 = vmatprep.mubr.f32.mxu0 0.0
        %1834 = vmatmul.mubr.f32.gmra.mrb[0].mxu0 %v1753
        %v1835 = vpop.f32.mrb[0].mxu0
        %v1836 = vadd.f32 0.0, %v1835
        %v1837 = vpop.f32.mrb[0].mxu0
        %1838 = vmatprep.mubr.f32.mxu0 0.0
        %1839 = vmatmul.mubr.f32.gmra.mrb[0].mxu0 %v1754
        %v1840 = vpop.f32.mrb[0].mxu0
        %v1841 = vadd.f32 0.0, %v1840
        %v1842 = vpop.f32.mrb[0].mxu0
        %1843 = vmatprep.mubr.f32.mxu0 0.0
        %1844 = vmatmul.mubr.f32.gmra.mrb[0].mxu0 %v1755
        %v1845 = vpop.f32.mrb[0].mxu0
        %v1846 = vadd.f32 0.0, %v1845
        %v1847 = vpop.f32.mrb[0].mxu0
        %1848 = vmatprep.mubr.f32.mxu0 0.0
        %1849 = vmatmul.mubr.f32.gmra.mrb[0].mxu0 %v1756
        %v1850 = vpop.f32.mrb[0].mxu0
        %v1851 = vadd.f32 0.0, %v1850
        %v1852 = vpop.f32.mrb[0].mxu0
        %1853 = vmatprep.mubr.f32.mxu0 0.0
        %1854 = vmatmul.mubr.f32.gmra.mrb[0].mxu0 %v1757
        %v1855 = vpop.f32.mrb[0].mxu0
        %v1856 = vadd.f32 0.0, %v1855
        %v1857 = vpop.f32.mrb[0].mxu0
        %1858 = vmatprep.mubr.f32.mxu0 0.0
        %1859 = vmatmul.mubr.f32.gmra.mrb[0].mxu0 %v1758
        %v1860 = vpop.f32.mrb[0].mxu0
        %v1861 = vadd.f32 0.0, %v1860
        %v1862 = vpop.f32.mrb[0].mxu0
        %1863 = vdwg.mxu0
        %v1864 = vadd.f32 %v1418, %v1826
        %v1865 = vadd.f32 %v1419, %v1831
        %v1866 = vadd.f32 %v1420, %v1836
        %v1867 = vadd.f32 %v1421, %v1841
        %v1868 = vadd.f32 %v1422, %v1846
        %v1869 = vadd.f32 %v1423, %v1851
        %v1870 = vadd.f32 %v1424, %v1856
        %v1871 = vadd.f32 %v1425, %v1861
        %v1872 = vlaneseq
        %v1873 = vshrl.u32 %v1872, 7
        %v1874 = vsub.s32 0, %v1873
        %v1875 = vrot.slane %v209, %v1874
        %v1876 = vadd.f32 %v1864, %v1875
        %v1877 = vadd.f32 %v1865, %v1875
        %v1878 = vadd.f32 %v1866, %v1875
        %v1879 = vadd.f32 %v1867, %v1875
        %v1880 = vadd.f32 %v1868, %v1875
        %v1881 = vadd.f32 %v1869, %v1875
        %v1882 = vadd.f32 %v1870, %v1875
        %v1883 = vadd.f32 %v1871, %v1875
        %v1885 = vsel %vm1059, 1.0, 0
        %1887 = vmatprep.subr.mxu0 0.0
        %1888 = vmatpush1.msra.mxu0 %v1876
        %1889 = vmatprep.subr.mxu0 0.0
        %1890 = vmatpush1.msra.mxu0 %v1877
        %1891 = vmatprep.subr.mxu0 0.0
        %1892 = vmatpush1.msra.mxu0 %v1878
        %1893 = vmatprep.subr.mxu0 0.0
        %1894 = vmatpush1.msra.mxu0 %v1879
        %1895 = vmatprep.subr.mxu0 0.0
        %1896 = vmatpush1.msra.mxu0 %v1880
        %1897 = vmatprep.subr.mxu0 0.0
        %1898 = vmatpush1.msra.mxu0 %v1881
        %1899 = vmatprep.subr.mxu0 0.0
        %1900 = vmatpush1.msra.mxu0 %v1882
        %1901 = vmatprep.subr.mxu0 0.0
        %1902 = vmatpush1.msra.mxu0 %v1883
        %1903 = vmatprep.subr.mxu0 0.0
        %1904 = vmatpush1.msra.mxu0 0.0
        %1905 = vmatprep.subr.mxu0 0.0
        %1906 = vmatpush1.msra.mxu0 0.0
        %1907 = vmatprep.subr.mxu0 0.0
        %1908 = vmatpush1.msra.mxu0 0.0
        %1909 = vmatprep.subr.mxu0 0.0
        %1910 = vmatpush1.msra.mxu0 0.0
        %1911 = vmatprep.subr.mxu0 0.0
        %1912 = vmatpush1.msra.mxu0 0.0
        %1913 = vmatprep.subr.mxu0 0.0
        %1914 = vmatpush1.msra.mxu0 0.0
        %1915 = vmatprep.subr.mxu0 0.0
        %1916 = vmatpush1.msra.mxu0 0.0
        %1917 = vmatprep.subr.mxu0 0.0
        %1918 = vmatpush1.msra.mxu0 0.0
        %1919 = vmatprep.subr.mxu0 0.0
        %1920 = vmatpush1.msra.mxu0 0.0
        %1921 = vmatprep.subr.mxu0 0.0
        %1922 = vmatpush1.msra.mxu0 0.0
        %1923 = vmatprep.subr.mxu0 0.0
        %1924 = vmatpush1.msra.mxu0 0.0
        %1925 = vmatprep.subr.mxu0 0.0
        %1926 = vmatpush1.msra.mxu0 0.0
        %1927 = vmatprep.subr.mxu0 0.0
        %1928 = vmatpush1.msra.mxu0 0.0
        %1929 = vmatprep.subr.mxu0 0.0
        %1930 = vmatpush1.msra.mxu0 0.0
        %1931 = vmatprep.subr.mxu0 0.0
        %1932 = vmatpush1.msra.mxu0 0.0
        %1933 = vmatprep.subr.mxu0 0.0
        %1934 = vmatpush1.msra.mxu0 0.0
        %1935 = vmatprep.subr.mxu0 0.0
        %1936 = vmatpush1.msra.mxu0 0.0
        %1937 = vmatprep.subr.mxu0 0.0
        %1938 = vmatpush1.msra.mxu0 0.0
        %1939 = vmatprep.subr.mxu0 0.0
        %1940 = vmatpush1.msra.mxu0 0.0
        %1941 = vmatprep.subr.mxu0 0.0
        %1942 = vmatpush1.msra.mxu0 0.0
        %1943 = vmatprep.subr.mxu0 0.0
        %1944 = vmatpush1.msra.mxu0 0.0
        %1945 = vmatprep.subr.mxu0 0.0
        %1946 = vmatpush1.msra.mxu0 0.0
        %1947 = vmatprep.subr.mxu0 0.0
        %1948 = vmatpush1.msra.mxu0 0.0
        %1949 = vmatprep.subr.mxu0 0.0
        %1950 = vmatpush1.msra.mxu0 0.0
        %1951 = vmatprep.mubr.f32.mxu0 0.0
        %1952 = vmatmul.mubr.f32.gmra.mrb[0].mxu0 %v1885
        %v1953 = vpop.f32.mrb[0].mxu0
        %v1954 = vadd.f32 0.0, %v1953
        %v1955 = vpop.f32.mrb[0].mxu0
        %1956 = vdwg.mxu0
        %v1957 = vlaneseq
        %v1958 = vshrl.u32 %v1957, 7
        %v1959 = vsub.s32 0, %v1958
        %v1960 = vrot.slane %v210, %v1959
        %v1962 = vsel %vm425, %v1954, 0
        %1964 = vmatprep.subr.mxu0 0.0
        %1965 = vmatpush1.msra.mxu0 %v195
        %1966 = vmatprep.subr.mxu0 0.0
        %1967 = vmatpush1.msra.mxu0 %v196
        %1968 = vmatprep.subr.mxu0 0.0
        %1969 = vmatpush1.msra.mxu0 %v197
        %1970 = vmatprep.subr.mxu0 0.0
        %1971 = vmatpush1.msra.mxu0 %v198
        %1972 = vmatprep.subr.mxu0 0.0
        %1973 = vmatpush1.msra.mxu0 0.0
        %1974 = vmatprep.subr.mxu0 0.0
        %1975 = vmatpush1.msra.mxu0 0.0
        %1976 = vmatprep.subr.mxu0 0.0
        %1977 = vmatpush1.msra.mxu0 0.0
        %1978 = vmatprep.subr.mxu0 0.0
        %1979 = vmatpush1.msra.mxu0 0.0
        %1980 = vmatprep.subr.mxu0 0.0
        %1981 = vmatpush1.msra.mxu0 0.0
        %1982 = vmatprep.subr.mxu0 0.0
        %1983 = vmatpush1.msra.mxu0 0.0
        %1984 = vmatprep.subr.mxu0 0.0
        %1985 = vmatpush1.msra.mxu0 0.0
        %1986 = vmatprep.subr.mxu0 0.0
        %1987 = vmatpush1.msra.mxu0 0.0
        %1988 = vmatprep.subr.mxu0 0.0
        %1989 = vmatpush1.msra.mxu0 0.0
        %1990 = vmatprep.subr.mxu0 0.0
        %1991 = vmatpush1.msra.mxu0 0.0
        %1992 = vmatprep.subr.mxu0 0.0
        %1993 = vmatpush1.msra.mxu0 0.0
        %1994 = vmatprep.subr.mxu0 0.0
        %1995 = vmatpush1.msra.mxu0 0.0
        %1996 = vmatprep.subr.mxu0 0.0
        %1997 = vmatpush1.msra.mxu0 0.0
        %1998 = vmatprep.subr.mxu0 0.0
        %1999 = vmatpush1.msra.mxu0 0.0
        %2000 = vmatprep.subr.mxu0 0.0
        %2001 = vmatpush1.msra.mxu0 0.0
        %2002 = vmatprep.subr.mxu0 0.0
        %2003 = vmatpush1.msra.mxu0 0.0
        %2004 = vmatprep.subr.mxu0 0.0
        %2005 = vmatpush1.msra.mxu0 0.0
        %2006 = vmatprep.subr.mxu0 0.0
        %2007 = vmatpush1.msra.mxu0 0.0
        %2008 = vmatprep.subr.mxu0 0.0
        %2009 = vmatpush1.msra.mxu0 0.0
        %2010 = vmatprep.subr.mxu0 0.0
        %2011 = vmatpush1.msra.mxu0 0.0
        %2012 = vmatprep.subr.mxu0 0.0
        %2013 = vmatpush1.msra.mxu0 0.0
        %2014 = vmatprep.subr.mxu0 0.0
        %2015 = vmatpush1.msra.mxu0 0.0
        %2016 = vmatprep.subr.mxu0 0.0
        %2017 = vmatpush1.msra.mxu0 0.0
        %2018 = vmatprep.subr.mxu0 0.0
        %2019 = vmatpush1.msra.mxu0 0.0
        %2020 = vmatprep.subr.mxu0 0.0
        %2021 = vmatpush1.msra.mxu0 0.0
        %2022 = vmatprep.subr.mxu0 0.0
        %2023 = vmatpush1.msra.mxu0 0.0
        %2024 = vmatprep.subr.mxu0 0.0
        %2025 = vmatpush1.msra.mxu0 0.0
        %2026 = vmatprep.subr.mxu0 0.0
        %2027 = vmatpush1.msra.mxu0 0.0
        %2028 = vmatprep.mubr.f32.mxu0 0.0
        %2029 = vmatmul.mubr.f32.gmra.mrb[0].mxu0 %v1962
        %v2030 = vpop.f32.mrb[0].mxu0
        %v2031 = vadd.f32 %v1960, %v2030
        %v2032 = vpop.f32.mrb[0].mxu0
        %2033 = vdwg.mxu0
        %2034 = vst [vmem:[%s156] sm:$0xff] %v2031
        %p2035 = scmp.lt.s32.totalorder %s14, 1
        %s2036 = scalar_select %p2035, %s14, 1
        %s2037 = smul.addr %s2036, 8
        %s2038 = scalar_lea.vmem %s2, %s2037
        // Predicated region
        $region33: #{wav2vec2_lora_cls_forward.1} parent=27 // pred_check
          %p2039 = pneg %p79
        $region34: #{wav2vec2_lora_cls_forward.1} parent=27 // pred_check_branch
          %2041 = sbr.rel (%p2039) target = $region36
        $region35: #{wav2vec2_lora_cls_forward.1} parent=27 // pred_region
          _
        $region36: #{wav2vec2_lora_cls_forward.1} parent=27 // pred_fallthru
          _
      $region28: #{wav2vec2_lora_cls_forward.1} parent=5 // pred_fallthru
        _
      %p2042 = scmp.le.s32.totalorder 2, %s9
      // Predicated region
      $region37: #{wav2vec2_lora_cls_forward.1} parent=5 // pred_check
        %p2043 = pneg %p2042
      $region38: #{wav2vec2_lora_cls_forward.1} parent=5 // pred_check_branch
        %2045 = sbr.rel (%p2043) target = $region40
      $region39: #{wav2vec2_lora_cls_forward.1} parent=5 // pred_region
        %s2046 = ssub.s32 %s9, 2
        // Predicated region
        $region41: #{wav2vec2_lora_cls_forward.1} parent=39 // pred_check
          %p2047 = pneg %p85
        $region42: #{wav2vec2_lora_cls_forward.1} parent=39 // pred_check_branch
          %2049 = sbr.rel (%p2047) target = $region44
        $region43: #{wav2vec2_lora_cls_forward.1} parent=39 // pred_region
          %p2050 = scmp.lt.s32.totalorder %s15, 1
          %s2051 = scalar_select %p2050, %s15, 1
          %s2052 = smul.addr %s2051, 8
          %s2053 = scalar_lea.vmem %s2, %s2052
        $region44: #{wav2vec2_lora_cls_forward.1} parent=39 // pred_fallthru
          _
      $region40: #{wav2vec2_lora_cls_forward.1} parent=5 // pred_fallthru
        _
    $region6: #{wav2vec2_lora_cls_forward.1} parent=1 // loop_footer
      %s13 = sadd.s32 1, %s9
    $region7: #{wav2vec2_lora_cls_forward.1} parent=1 // loop_footer_branch
      %8 = sbr.rel target = $region3
    $region8: #{wav2vec2_lora_cls_forward.1} parent=1 // loop_exit
      _
    %2054 = vsyncpa [#allocation3], 1
    %s2055 = scalar_lea.sflag [#allocation3], 1
    %2056 = vsyncpa %s2055, 1

</llo_original>
